<compile_context>
chip_gen: v7x
topology: tpu7x:2x2x1
jax: 0.10.0
libtpu: 0.0.40
codegen_flags: <defaults>
</compile_context>

<pallas_src>
import jax
import jax.numpy as jnp
from jax.experimental import pallas as pl
from jax.experimental.pallas import tpu as pltpu

LAYERS = [2, 32, 32, 32, 1]   # Burgers-style PINN: (x, t) -> u
H = 32                        # hidden width
_MAX_TILE = 8192              # lane-axis batch tile cap (v5e scoped-VMEM friendly)


def _cdiv(a, b):
    return (a + b - 1) // b


def _round_up(a, b):
    return _cdiv(a, b) * b


def _pick_tile(n):
    """Batch tile: big (amortize ~0.35us/step), multiple of 128, even grid on v7x."""
    tile = min(_MAX_TILE, _round_up(max(_cdiv(n, 2), 1), 128))
    steps = _cdiv(n, tile)
    if steps > 2 and steps % 2 == 1:
        # re-balance so the grid is even (v7x has 2 TensorCores per chip)
        tile = min(_MAX_TILE, _round_up(_cdiv(n, steps + 1), 128))
    return tile


def _mlp_kernel(x_ref, w0_ref, w12_ref, w3_ref, b_ref, o_ref):
    """Fused MLP forward for one batch tile; activations laid out [feat, batch]."""
    x = x_ref[...]                                   # (2, T) lane-dense

    b0 = b_ref[0 * H:1 * H, :]                       # (32, 1) -> broadcast over lanes
    b1 = b_ref[1 * H:2 * H, :]
    b2 = b_ref[2 * H:3 * H, :]
    b3 = b_ref[3 * H:3 * H + 1, :]                   # (1, 1)

    w1 = w12_ref[0:H, :]                             # (32, 32)
    w2 = w12_ref[H:2 * H, :]

    h = jnp.tanh(jnp.dot(w0_ref[...], x, preferred_element_type=jnp.float32) + b0)
    h = jnp.tanh(jnp.dot(w1, h, preferred_element_type=jnp.float32) + b1)
    h = jnp.tanh(jnp.dot(w2, h, preferred_element_type=jnp.float32) + b2)

    # Final Linear(32 -> 1) also on the MXU (VALU/XLU slots stay free).
    out = jnp.dot(w3_ref[...], h, preferred_element_type=jnp.float32) + b3
    o_ref[...] = out.astype(o_ref.dtype)             # (1, T) lane-dense store


@jax.jit
def pinn_forward(x, weights, biases):
    """x: [N, 2] f32; weights in PyTorch [out, in] layout -> [N, 1] f32."""
    n, f_in = x.shape
    assert f_in == LAYERS[0]

    tile = _pick_tile(n)
    grid = (_cdiv(n, tile),)

    # Single transposed [feat, batch] view; no explicit batch padding (Pallas
    # bounds the partial last block's input DMA and output store).
    x_t = x.astype(jnp.float32).T                    # (2, n)

    w0, w1, w2, w3 = [w.astype(jnp.float32) for w in weights]
    b0, b1, b2, b3 = [b.astype(jnp.float32) for b in biases]
    w12 = jnp.concatenate([w1, w2], axis=0)                        # (64, 32)
    bias_slab = jnp.concatenate([b0, b1, b2, b3]).reshape(-1, 1)   # (97, 1)

    def resident(shape):
        # full-array block, same block every step -> fetched once, stays in VMEM
        return pl.BlockSpec(shape, lambda i: (0, 0))

    out_t = pl.pallas_call(
        _mlp_kernel,
        out_shape=jax.ShapeDtypeStruct((1, n), jnp.float32),
        grid_spec=pltpu.PrefetchScalarGridSpec(
            num_scalar_prefetch=0,
            grid=grid,
            in_specs=[
                pl.BlockSpec((f_in, tile), lambda i: (0, i)),   # x tile, lane-dense
                resident(w0.shape),                             # (32, 2)
                resident(w12.shape),                            # (64, 32)
                resident(w3.shape),                             # (1, 32)
                resident(bias_slab.shape),                      # (97, 1)
            ],
            out_specs=pl.BlockSpec((1, tile), lambda i: (0, i)),
        ),
        compiler_params=pltpu.CompilerParams(
            dimension_semantics=("parallel",)),
    )(x_t, w0, w12, w3, bias_slab)

    return out_t.reshape(n, LAYERS[-1])


def init_params(key):
    """Deterministic init matching nn.Linear's U(-1/sqrt(in), 1/sqrt(in)).

    Weights are stored in PyTorch's native [out, in] layout.
    """
    weights, biases = [], []
    for i in range(len(LAYERS) - 1):
        fin, fout = LAYERS[i], LAYERS[i + 1]
        key, kw, kb = jax.random.split(key, 3)
        bound = 1.0 / jnp.sqrt(jnp.float32(fin))
        w = jax.random.uniform(kw, (fout, fin), jnp.float32, -bound, bound)
        b = jax.random.uniform(kb, (fout,), jnp.float32, -bound, bound)
        weights.append(w)
        biases.append(b)
    return weights, biases


def reference_forward(x, weights, biases):
    """Pure-JAX reference with PyTorch Linear semantics (x @ W.T + b)."""
    h = x
    for i in range(len(weights) - 1):
        h = jnp.tanh(h @ weights[i].T + biases[i])
    return h @ weights[-1].T + biases[-1]


if __name__ == "__main__":
    key = jax.random.PRNGKey(0)
    key, kx = jax.random.split(key)

    # Deliberately NOT a multiple of the tile: exercises the partial last block
    # and gives a 2-step grid (balanced across v7x's two TensorCores).
    N = 2000
    x = jax.random.normal(kx, (N, LAYERS[0]), jnp.float32)

    weights, biases = init_params(key)

    out = pinn_forward(x, weights, biases)
    out = jax.block_until_ready(out)

    ref = reference_forward(x, weights, biases)
    err = float(jnp.max(jnp.abs(out - ref)))
    assert out.shape == (N, LAYERS[-1]), out.shape
    assert err < 1e-4, f"mismatch vs reference: {err}"

    print("KERNEL_OK")
</pallas_src>

<mosaic_0001>
module attributes {stable_mosaic.version = 11 : i64} {
  func.func @_mlp_kernel(%arg0: i32, %arg1: memref<2x1024xf32, #tpu.memory_space<vmem>>, %arg2: memref<32x2xf32, #tpu.memory_space<vmem>>, %arg3: memref<64x32xf32, #tpu.memory_space<vmem>>, %arg4: memref<1x32xf32, #tpu.memory_space<vmem>>, %arg5: memref<97x1xf32, #tpu.memory_space<vmem>>, %arg6: memref<1x1024xf32, #tpu.memory_space<vmem>>) attributes {dimension_semantics = [#tpu.dimension_semantics<parallel>], iteration_bounds = array<i64: 2>, scalar_prefetch = 0 : i64, scratch_operands = 0 : i64, tpu.core_type = #tpu.core_type<tc>, window_params = [{transform_indices = @transform_0, window_bounds = array<i64: 2, 1024>}, {pipeline_mode = #tpu.pipeline_mode<synchronous>, transform_indices = @transform_1, window_bounds = array<i64: 32, 2>}, {pipeline_mode = #tpu.pipeline_mode<synchronous>, transform_indices = @transform_2, window_bounds = array<i64: 64, 32>}, {pipeline_mode = #tpu.pipeline_mode<synchronous>, transform_indices = @transform_3, window_bounds = array<i64: 1, 32>}, {pipeline_mode = #tpu.pipeline_mode<synchronous>, transform_indices = @transform_4, window_bounds = array<i64: 97, 1>}, {transform_indices = @transform_5, window_bounds = array<i64: 1, 1024>}]} {
    %c0 = arith.constant 0 : index
    %c0_0 = arith.constant 0 : index
    %0 = vector.load %arg1[%c0, %c0_0] : memref<2x1024xf32, #tpu.memory_space<vmem>>, vector<2x1024xf32>
    %c0_1 = arith.constant 0 : index
    %c0_2 = arith.constant 0 : index
    %1 = vector.load %arg5[%c0_1, %c0_2] : memref<97x1xf32, #tpu.memory_space<vmem>>, vector<32x1xf32>
    %c32 = arith.constant 32 : index
    %c0_3 = arith.constant 0 : index
    %2 = vector.load %arg5[%c32, %c0_3] : memref<97x1xf32, #tpu.memory_space<vmem>>, vector<32x1xf32>
    %c64 = arith.constant 64 : index
    %c0_4 = arith.constant 0 : index
    %3 = vector.load %arg5[%c64, %c0_4] : memref<97x1xf32, #tpu.memory_space<vmem>>, vector<32x1xf32>
    %c96 = arith.constant 96 : index
    %c0_5 = arith.constant 0 : index
    %4 = vector.load %arg5[%c96, %c0_5] : memref<97x1xf32, #tpu.memory_space<vmem>>, vector<1x1xf32>
    %c0_6 = arith.constant 0 : index
    %c0_7 = arith.constant 0 : index
    %5 = vector.load %arg3[%c0_6, %c0_7] : memref<64x32xf32, #tpu.memory_space<vmem>>, vector<32x32xf32>
    %c32_8 = arith.constant 32 : index
    %c0_9 = arith.constant 0 : index
    %6 = vector.load %arg3[%c32_8, %c0_9] : memref<64x32xf32, #tpu.memory_space<vmem>>, vector<32x32xf32>
    %c0_10 = arith.constant 0 : index
    %c0_11 = arith.constant 0 : index
    %7 = vector.load %arg2[%c0_10, %c0_11] : memref<32x2xf32, #tpu.memory_space<vmem>>, vector<32x2xf32>
    %cst = arith.constant dense<0.000000e+00> : vector<32x1024xf32>
    %8 = tpu.matmul %7, %0, %cst {dimension_numbers = #tpu.dot_dimension_numbers<[1], [0], [0], [1], [0, 0, 1, 1], [], []>} : vector<32x2xf32>, vector<2x1024xf32>, vector<32x1024xf32> -> vector<32x1024xf32>
    %9 = vector.broadcast %1 : vector<32x1xf32> to vector<32x1024xf32>
    %10 = arith.addf %8, %9 : vector<32x1024xf32>
    %11 = math.tanh %10 : vector<32x1024xf32>
    %cst_12 = arith.constant dense<0.000000e+00> : vector<32x1024xf32>
    %12 = tpu.matmul %5, %11, %cst_12 {dimension_numbers = #tpu.dot_dimension_numbers<[1], [0], [0], [1], [0, 0, 1, 1], [], []>} : vector<32x32xf32>, vector<32x1024xf32>, vector<32x1024xf32> -> vector<32x1024xf32>
    %13 = vector.broadcast %2 : vector<32x1xf32> to vector<32x1024xf32>
    %14 = arith.addf %12, %13 : vector<32x1024xf32>
    %15 = math.tanh %14 : vector<32x1024xf32>
    %cst_13 = arith.constant dense<0.000000e+00> : vector<32x1024xf32>
    %16 = tpu.matmul %6, %15, %cst_13 {dimension_numbers = #tpu.dot_dimension_numbers<[1], [0], [0], [1], [0, 0, 1, 1], [], []>} : vector<32x32xf32>, vector<32x1024xf32>, vector<32x1024xf32> -> vector<32x1024xf32>
    %17 = vector.broadcast %3 : vector<32x1xf32> to vector<32x1024xf32>
    %18 = arith.addf %16, %17 : vector<32x1024xf32>
    %19 = math.tanh %18 : vector<32x1024xf32>
    %c0_14 = arith.constant 0 : index
    %c0_15 = arith.constant 0 : index
    %20 = vector.load %arg4[%c0_14, %c0_15] : memref<1x32xf32, #tpu.memory_space<vmem>>, vector<1x32xf32>
    %cst_16 = arith.constant dense<0.000000e+00> : vector<1x1024xf32>
    %21 = tpu.matmul %20, %19, %cst_16 {dimension_numbers = #tpu.dot_dimension_numbers<[1], [0], [0], [1], [0, 0, 1, 1], [], []>} : vector<1x32xf32>, vector<32x1024xf32>, vector<1x1024xf32> -> vector<1x1024xf32>
    %22 = vector.broadcast %4 : vector<1x1xf32> to vector<1x1024xf32>
    %23 = arith.addf %21, %22 : vector<1x1024xf32>
    %c0_17 = arith.constant 0 : index
    %c0_18 = arith.constant 0 : index
    %24 = vector.load %arg6[%c0_17, %c0_18] : memref<1x1024xf32, #tpu.memory_space<vmem>>, vector<1x1024xf32>
    tpu.vector_store %arg6[%c0_17, %c0_18], %23 {strides = array<i32>} : memref<1x1024xf32, #tpu.memory_space<vmem>>, vector<1x1024xf32>,
    return
  }
  func.func @transform_0(%arg0: i32) -> (i32, i32) {
    %c0_i32 = arith.constant 0 : i32
    %c0_i32_0 = arith.constant 0 : i32
    return %c0_i32, %arg0 : i32, i32
  }
  func.func @transform_1(%arg0: i32) -> (i32, i32) {
    %c0_i32 = arith.constant 0 : i32
    %c0_i32_0 = arith.constant 0 : i32
    %c0_i32_1 = arith.constant 0 : i32
    return %c0_i32, %c0_i32_0 : i32, i32
  }
  func.func @transform_2(%arg0: i32) -> (i32, i32) {
    %c0_i32 = arith.constant 0 : i32
    %c0_i32_0 = arith.constant 0 : i32
    %c0_i32_1 = arith.constant 0 : i32
    return %c0_i32, %c0_i32_0 : i32, i32
  }
  func.func @transform_3(%arg0: i32) -> (i32, i32) {
    %c0_i32 = arith.constant 0 : i32
    %c0_i32_0 = arith.constant 0 : i32
    %c0_i32_1 = arith.constant 0 : i32
    return %c0_i32, %c0_i32_0 : i32, i32
  }
  func.func @transform_4(%arg0: i32) -> (i32, i32) {
    %c0_i32 = arith.constant 0 : i32
    %c0_i32_0 = arith.constant 0 : i32
    %c0_i32_1 = arith.constant 0 : i32
    return %c0_i32, %c0_i32_0 : i32, i32
  }
  func.func @transform_5(%arg0: i32) -> (i32, i32) {
    %c0_i32 = arith.constant 0 : i32
    %c0_i32_0 = arith.constant 0 : i32
    return %c0_i32, %arg0 : i32, i32
  }
}

</mosaic_0001>

<llo_original>
// kernel: pinn_forward.1
$region0: #{pinn_forward.1}
  #allocation0 [shape = 'u32[]', space=smem, size = 0x4, offset = 0x4, fixed_abs, tag = 'smem constant byte address 0x4 - core index']
  #allocation1 [shape = 'u32[144,128]{1,0:T(1,128)}', space=vmem, size = 0x12000, scoped, tag = 'internal scratch']
  %s0 = inlined_call_operand.vmem [shape: f32[2,2000], index: 0, kind: input, shape index: {}]
  %s1 = inlined_call_operand.vmem [shape: f32[32,2], index: 1, kind: input, shape index: {}]
  %s2 = inlined_call_operand.vmem [shape: f32[64,32], index: 2, kind: input, shape index: {}]
  %s3 = inlined_call_operand.vmem [shape: f32[1,32], index: 3, kind: input, shape index: {}]
  %s4 = inlined_call_operand.vmem [shape: f32[97,1], index: 4, kind: input, shape index: {}]
  %s5 = inlined_call_operand.hbm [shape: f32[1,2000], index: 5, kind: output, shape index: {}]
  %s6 = sld [smem:[#allocation0]]
  $region53: #{pinn_forward.1} parent=0
    _
  %s8 = ssub.s32 1, %s6
  %s9 = scalar_select 0, %s8, %s6
  $region1: #{pinn_forward.1} parent=0
    #allocation2 [shape = 'u8[8192]{0}', space=vmem, size = 0x2000, scoped, tag = 'output window, operand 0']
    #allocation3 [shape = 's32[2]{0}', space=sflag, size = 0x8, scoped, tag = 'scoped memory for pinn_forward.1']
    %10 = vsyncpa [#allocation3], 0
    %s11 = scalar_lea.sflag [#allocation3], 1
    %12 = vsyncpa %s11, 0
    loop: start=0, step=1, limit=4
    $region2: #{pinn_forward.1} parent=1 // loop_pre_header
      _
    $region3: #{pinn_forward.1} parent=1 // loop_header
      %s14 = sphi 0, %s18
      %p15 = scmp.ge.s32.totalorder %s14, 4
      %s24 = sphi 0, %s26
      %s27 = sphi 0, %s24
      %s28 = sphi 0, %s27
      %s44 = sphi 0, %s28
      %s48 = sphi 0, %s48
      %s50 = sphi 0, %s48
      %s51 = sphi 0, %s50
      %s65 = sphi 0, %s51
      %s69 = sphi 0, %s69
      %s71 = sphi 0, %s69
      %s72 = sphi 0, %s71
      %s86 = sphi 0, %s72
      %s90 = sphi 0, %s90
      %s92 = sphi 0, %s90
      %s93 = sphi 0, %s92
      %s107 = sphi 0, %s93
      %s111 = sphi 0, %s111
      %s113 = sphi 0, %s111
      %s114 = sphi 0, %s113
      %s128 = sphi 0, %s114
      %s134 = sphi 0, %s136
      %s137 = sphi 0, %s134
      %s138 = sphi 0, %s137
      %s154 = sphi 0, %s138
    $region4: #{pinn_forward.1} parent=1 // loop_header_branch
      %17 = sbr.rel (%p15) target = $region8
    $region5: #{pinn_forward.1} parent=1 // loop_body
      %s19 = ssub.s32 %s14, 1
      %s20 = ssub.s32 %s14, 2
      %s21 = sadd.s32 %s14, 1
      %s22 = ssub.s32 %s14, %s21
      %p23 = scmp.eq.s32.totalorder %s22, 0
      %s25 = sadd.s32 %s24, 1
      %s26 = scalar_select %p23, %s24, %s25
      %p29 = pneg %p23
      %p30 = scmp.eq.s32.totalorder %s14, 1
      %p31 = por %p29, %p30
      %p32 = scmp.ne.s32.totalorder %s24, %s27
      %p33 = scmp.eq.s32.totalorder %s14, 0
      %p34 = por %p32, %p33
      %p35 = scmp.ne.s32.totalorder %s24, %s27
      %p36 = scmp.eq.s32.totalorder %s19, 1
      %p37 = por %p35, %p36
      %p38 = scmp.ne.s32.totalorder %s27, %s28
      %p39 = scmp.eq.s32.totalorder %s19, 0
      %p40 = por %p38, %p39
      %p41 = scmp.ne.s32.totalorder %s27, %s28
      %p42 = scmp.eq.s32.totalorder %s20, 1
      %p43 = por %p41, %p42
      %p45 = scmp.ne.s32.totalorder %s28, %s44
      %p46 = scmp.eq.s32.totalorder %s20, 0
      %p47 = por %p45, %p46
      %s49 = sadd.s32 %s48, 1
      %p52 = scmp.eq.s32.totalorder %s14, 1
      %p53 = scmp.ne.s32.totalorder %s48, %s50
      %p54 = scmp.eq.s32.totalorder %s14, 0
      %p55 = por %p53, %p54
      %p56 = scmp.ne.s32.totalorder %s48, %s50
      %p57 = scmp.eq.s32.totalorder %s19, 1
      %p58 = por %p56, %p57
      %p59 = scmp.ne.s32.totalorder %s50, %s51
      %p60 = scmp.eq.s32.totalorder %s19, 0
      %p61 = por %p59, %p60
      %p62 = scmp.ne.s32.totalorder %s50, %s51
      %p63 = scmp.eq.s32.totalorder %s20, 1
      %p64 = por %p62, %p63
      %p66 = scmp.ne.s32.totalorder %s51, %s65
      %p67 = scmp.eq.s32.totalorder %s20, 0
      %p68 = por %p66, %p67
      %s70 = sadd.s32 %s69, 1
      %p73 = scmp.eq.s32.totalorder %s14, 1
      %p74 = scmp.ne.s32.totalorder %s69, %s71
      %p75 = scmp.eq.s32.totalorder %s14, 0
      %p76 = por %p74, %p75
      %p77 = scmp.ne.s32.totalorder %s69, %s71
      %p78 = scmp.eq.s32.totalorder %s19, 1
      %p79 = por %p77, %p78
      %p80 = scmp.ne.s32.totalorder %s71, %s72
      %p81 = scmp.eq.s32.totalorder %s19, 0
      %p82 = por %p80, %p81
      %p83 = scmp.ne.s32.totalorder %s71, %s72
      %p84 = scmp.eq.s32.totalorder %s20, 1
      %p85 = por %p83, %p84
      %p87 = scmp.ne.s32.totalorder %s72, %s86
      %p88 = scmp.eq.s32.totalorder %s20, 0
      %p89 = por %p87, %p88
      %s91 = sadd.s32 %s90, 1
      %p94 = scmp.eq.s32.totalorder %s14, 1
      %p95 = scmp.ne.s32.totalorder %s90, %s92
      %p96 = scmp.eq.s32.totalorder %s14, 0
      %p97 = por %p95, %p96
      %p98 = scmp.ne.s32.totalorder %s90, %s92
      %p99 = scmp.eq.s32.totalorder %s19, 1
      %p100 = por %p98, %p99
      %p101 = scmp.ne.s32.totalorder %s92, %s93
      %p102 = scmp.eq.s32.totalorder %s19, 0
      %p103 = por %p101, %p102
      %p104 = scmp.ne.s32.totalorder %s92, %s93
      %p105 = scmp.eq.s32.totalorder %s20, 1
      %p106 = por %p104, %p105
      %p108 = scmp.ne.s32.totalorder %s93, %s107
      %p109 = scmp.eq.s32.totalorder %s20, 0
      %p110 = por %p108, %p109
      %s112 = sadd.s32 %s111, 1
      %p115 = scmp.eq.s32.totalorder %s14, 1
      %p116 = scmp.ne.s32.totalorder %s111, %s113
      %p117 = scmp.eq.s32.totalorder %s14, 0
      %p118 = por %p116, %p117
      %p119 = scmp.ne.s32.totalorder %s111, %s113
      %p120 = scmp.eq.s32.totalorder %s19, 1
      %p121 = por %p119, %p120
      %p122 = scmp.ne.s32.totalorder %s113, %s114
      %p123 = scmp.eq.s32.totalorder %s19, 0
      %p124 = por %p122, %p123
      %p125 = scmp.ne.s32.totalorder %s113, %s114
      %p126 = scmp.eq.s32.totalorder %s20, 1
      %p127 = por %p125, %p126
      %p129 = scmp.ne.s32.totalorder %s114, %s128
      %p130 = scmp.eq.s32.totalorder %s20, 0
      %p131 = por %p129, %p130
      %s132 = ssub.s32 %s14, %s21
      %p133 = scmp.eq.s32.totalorder %s132, 0
      %s135 = sadd.s32 %s134, 1
      %s136 = scalar_select %p133, %s134, %s135
      %p139 = pneg %p133
      %p140 = scmp.eq.s32.totalorder %s14, 1
      %p141 = por %p139, %p140
      %p142 = scmp.ne.s32.totalorder %s134, %s137
      %p143 = scmp.eq.s32.totalorder %s14, 0
      %p144 = por %p142, %p143
      %p145 = scmp.ne.s32.totalorder %s134, %s137
      %p146 = scmp.eq.s32.totalorder %s19, 1
      %p147 = por %p145, %p146
      %p148 = scmp.ne.s32.totalorder %s137, %s138
      %p149 = scmp.eq.s32.totalorder %s19, 0
      %p150 = por %p148, %p149
      %p151 = scmp.ne.s32.totalorder %s137, %s138
      %p152 = scmp.eq.s32.totalorder %s20, 1
      %p153 = por %p151, %p152
      %p155 = scmp.ne.s32.totalorder %s138, %s154
      %p156 = scmp.eq.s32.totalorder %s20, 0
      %p157 = por %p155, %p156
      %p158 = scmp.le.s32.totalorder 1, %s14
      %p159 = scmp.lt.s32.totalorder %s14, 3
      %p160 = pnand %p158, %p159
      %p161 = pneg %p160
      // Predicated region
      $region9: #{pinn_forward.1} parent=5 // pred_check
        _
      $region10: #{pinn_forward.1} parent=5 // pred_check_branch
        %163 = sbr.rel (%p160) target = $region12
      $region11: #{pinn_forward.1} parent=5 // pred_region
        %s164 = ssub.s32 %s14, 1
        // Predicated region
        $region13: #{pinn_forward.1} parent=11 // pred_check
          %p165 = pneg %p61
        $region14: #{pinn_forward.1} parent=11 // pred_check_branch
          %167 = sbr.rel (%p165) target = $region16
        $region15: #{pinn_forward.1} parent=11 // pred_region
          _
        $region16: #{pinn_forward.1} parent=11 // pred_fallthru
          _
        // Predicated region
        $region17: #{pinn_forward.1} parent=11 // pred_check
          %p168 = pneg %p82
        $region18: #{pinn_forward.1} parent=11 // pred_check_branch
          %170 = sbr.rel (%p168) target = $region20
        $region19: #{pinn_forward.1} parent=11 // pred_region
          _
        $region20: #{pinn_forward.1} parent=11 // pred_fallthru
          _
        // Predicated region
        $region21: #{pinn_forward.1} parent=11 // pred_check
          %p171 = pneg %p103
        $region22: #{pinn_forward.1} parent=11 // pred_check_branch
          %173 = sbr.rel (%p171) target = $region24
        $region23: #{pinn_forward.1} parent=11 // pred_region
          _
        $region24: #{pinn_forward.1} parent=11 // pred_fallthru
          _
        // Predicated region
        $region25: #{pinn_forward.1} parent=11 // pred_check
          %p174 = pneg %p124
        $region26: #{pinn_forward.1} parent=11 // pred_check_branch
          %176 = sbr.rel (%p174) target = $region28
        $region27: #{pinn_forward.1} parent=11 // pred_region
          _
        $region28: #{pinn_forward.1} parent=11 // pred_fallthru
          _
      $region12: #{pinn_forward.1} parent=5 // pred_fallthru
        _
      %p177 = scmp.lt.s32.totalorder %s14, 2
      // Predicated region
      $region29: #{pinn_forward.1} parent=5 // pred_check
        %p178 = pneg %p177
      $region30: #{pinn_forward.1} parent=5 // pred_check_branch
        %180 = sbr.rel (%p178) target = $region32
      $region31: #{pinn_forward.1} parent=5 // pred_region
        // Predicated region
        $region33: #{pinn_forward.1} parent=31 // pred_check
          %p181 = pneg %p34
        $region34: #{pinn_forward.1} parent=31 // pred_check_branch
          %183 = sbr.rel (%p181) target = $region36
        $region35: #{pinn_forward.1} parent=31 // pred_region
          %s184 = smul.u32 8, %s14
          %p185 = scmp.lt.s32.totalorder %s184, 15
          %s186 = scalar_select %p185, %s184, 15
          %s187 = smul.addr %s186, 2
          %s188 = scalar_lea.vmem %s0, %s187
          %s189 = smul.u32 8, %s14
        $region36: #{pinn_forward.1} parent=31 // pred_fallthru
          _
      $region32: #{pinn_forward.1} parent=5 // pred_fallthru
        _
      %p190 = scmp.le.s32.totalorder 1, %s14
      %p191 = scmp.lt.s32.totalorder %s14, 3
      %p192 = pnand %p190, %p191
      %p193 = pneg %p192
      // Predicated region
      $region37: #{pinn_forward.1} parent=5 // pred_check
        _
      $region38: #{pinn_forward.1} parent=5 // pred_check_branch
        %195 = sbr.rel (%p192) target = $region40
      $region39: #{pinn_forward.1} parent=5 // pred_region
        %s196 = ssub.s32 %s14, 1
        %s197 = smul.u32 8, %s19
        %p198 = scmp.lt.s32.totalorder %s197, 15
        %s199 = scalar_select %p198, %s197, 15
        %s200 = smul.addr %s199, 2
        %s201 = scalar_lea.vmem %s0, %s200
        %p202 = pneg %p40
        %p203 = pneg %p37
        %p204 = pneg %p61
        %p205 = pneg %p58
        %p206 = pneg %p82
        %p207 = pneg %p79
        %p208 = pneg %p103
        %p209 = pneg %p100
        %p210 = pneg %p124
        %p211 = pneg %p121
        %p212 = pneg %p150
        %p213 = pneg %p147
        %s214 = sand.u32 %s137, 1
        %s215 = scalar_lea.sflag [#allocation3], %s214
        %s216 = sand.u32 %s137, 1
        %s217 = smul.addr %s216, 8
        %s218 = scalar_lea.vmem [#allocation2], %s217
        %s219 = smul.u32 8, %s19
        %p220 = scmp.lt.s32.totalorder %s219, 15
        %s221 = scalar_select %p220, %s219, 15
        %s222 = smul.addr %s221, 2
        %s223 = scalar_lea.vmem %s0, %s222
        %s224 = smul.u32 8, %s19
        %s225 = smul.u32 8, %s19
        %v226 = vld [vmem:[%s223] sm:$0xff]
        %v227 = vld [vmem:[%s223 + $0x8] sm:$0xff]
        %v228 = vld [vmem:[%s4] sm:$0xff]
        %v229 = vld [vmem:[%s4 + $0x8] sm:$0xff]
        %v230 = vld [vmem:[%s4 + $0x10] sm:$0xff]
        %v231 = vld [vmem:[%s4 + $0x18] sm:$0xff]
        %v232 = vld [vmem:[%s4 + $0x20] sm:$0xff]
        %v233 = vld [vmem:[%s4 + $0x28] sm:$0xff]
        %v234 = vld [vmem:[%s4 + $0x30] sm:$0xff]
        %v235 = vld [vmem:[%s4 + $0x38] sm:$0xff]
        %v236 = vld [vmem:[%s4 + $0x40] sm:$0xff]
        %v237 = vld [vmem:[%s4 + $0x48] sm:$0xff]
        %v238 = vld [vmem:[%s4 + $0x50] sm:$0xff]
        %v239 = vld [vmem:[%s4 + $0x58] sm:$0xff]
        %v240 = vld [vmem:[%s4 + $0x60] sm:$0x1]
        %v241 = vld [vmem:[%s2] sm:$0xff]
        %v242 = vld [vmem:[%s2 + $0x8] sm:$0xff]
        %v243 = vld [vmem:[%s2 + $0x10] sm:$0xff]
        %v244 = vld [vmem:[%s2 + $0x18] sm:$0xff]
        %v245 = vld [vmem:[%s2 + $0x20] sm:$0xff]
        %v246 = vld [vmem:[%s2 + $0x28] sm:$0xff]
        %v247 = vld [vmem:[%s2 + $0x30] sm:$0xff]
        %v248 = vld [vmem:[%s2 + $0x38] sm:$0xff]
        %v249 = vld [vmem:[%s1] sm:$0xff]
        %v250 = vld [vmem:[%s1 + $0x8] sm:$0xff]
        %v251 = vld [vmem:[%s1 + $0x10] sm:$0xff]
        %v252 = vld [vmem:[%s1 + $0x18] sm:$0xff]
        %254 = vset.pattern.permute.xlu0 0
        %255 = vperm.xlu0 %254, %v228
        %v256 = vpop.permute.xlu0 %255
        %259 = vset.pattern.permute.xlu0 0
        %260 = vperm.xlu0 %259, %v229
        %v261 = vpop.permute.xlu0 %260
        %264 = vset.pattern.permute.xlu0 0
        %265 = vperm.xlu0 %264, %v230
        %v266 = vpop.permute.xlu0 %265
        %269 = vset.pattern.permute.xlu0 0
        %270 = vperm.xlu0 %269, %v231
        %v271 = vpop.permute.xlu0 %270
        %v275 = vcombine.high %v226, %v226
        %v277 = vunpack.c.l.s4 1983009808
        %v278 = vunpack.c.0.s8 %v277
        %v279 = vlaneseq
        %v280 = vshrl.u32 %v279, 7
        %v281 = vsub.s32 %v278, %v280
        %v282 = vrot.slane %v226, %v281
        %v284 = vunpack.c.l.s4 1983009808
        %v285 = vunpack.c.0.s8 %v284
        %v286 = vlaneseq
        %v287 = vshrl.u32 %v286, 7
        %v288 = vsub.s32 %v285, %v287
        %v289 = vrot.slane %v275, %v288
        %v290 = vcombine.high %v282, %v282
        %v291 = vcombine.high %v289, %v289
        %v292 = vcombine.high %v227, %v227
        %v294 = vunpack.c.l.s4 1983009808
        %v295 = vunpack.c.0.s8 %v294
        %v296 = vlaneseq
        %v297 = vshrl.u32 %v296, 7
        %v298 = vsub.s32 %v295, %v297
        %v299 = vrot.slane %v227, %v298
        %v301 = vunpack.c.l.s4 1983009808
        %v302 = vunpack.c.0.s8 %v301
        %v303 = vlaneseq
        %v304 = vshrl.u32 %v303, 7
        %v305 = vsub.s32 %v302, %v304
        %v306 = vrot.slane %v292, %v305
        %v307 = vcombine.high %v299, %v299
        %v308 = vcombine.high %v306, %v306
        %vm309 = vcmask 15360
        %v311 = vsel %vm309, %v249, 0
        %v314 = vsel %vm309, %v250, 0
        %v317 = vsel %vm309, %v251, 0
        %v320 = vsel %vm309, %v252, 0
        %vm322 = vcmask 1041408
        %v323 = vsel %vm322, %v282, 0
        %v325 = vsel %vm322, %v290, 0
        %v327 = vsel %vm322, %v289, 0
        %v329 = vsel %vm322, %v291, 0
        %v331 = vsel %vm322, %v299, 0
        %v333 = vsel %vm322, %v307, 0
        %v335 = vsel %vm322, %v306, 0
        %v337 = vsel %vm322, %v308, 0
        %339 = vmatprep.subr.mxu0 %v325
        %340 = vmatpush1.msra.mxu0 %v323
        %341 = vmatprep.subr.mxu0 0.0
        %342 = vmatpush1.msra.mxu0 0.0
        %343 = vmatprep.subr.mxu0 0.0
        %344 = vmatpush1.msra.mxu0 0.0
        %345 = vmatprep.subr.mxu0 0.0
        %346 = vmatpush1.msra.mxu0 0.0
        %347 = vmatprep.subr.mxu0 0.0
        %348 = vmatpush1.msra.mxu0 0.0
        %349 = vmatprep.subr.mxu0 0.0
        %350 = vmatpush1.msra.mxu0 0.0
        %351 = vmatprep.subr.mxu0 0.0
        %352 = vmatpush1.msra.mxu0 0.0
        %353 = vmatprep.subr.mxu0 0.0
        %354 = vmatpush1.msra.mxu0 0.0
        %355 = vmatprep.subr.mxu0 0.0
        %356 = vmatpush1.msra.mxu0 0.0
        %357 = vmatprep.subr.mxu0 0.0
        %358 = vmatpush1.msra.mxu0 0.0
        %359 = vmatprep.subr.mxu0 0.0
        %360 = vmatpush1.msra.mxu0 0.0
        %361 = vmatprep.subr.mxu0 0.0
        %362 = vmatpush1.msra.mxu0 0.0
        %363 = vmatprep.subr.mxu0 0.0
        %364 = vmatpush1.msra.mxu0 0.0
        %365 = vmatprep.subr.mxu0 0.0
        %366 = vmatpush1.msra.mxu0 0.0
        %367 = vmatprep.subr.mxu0 0.0
        %368 = vmatpush1.msra.mxu0 0.0
        %369 = vmatprep.subr.mxu0 0.0
        %370 = vmatpush1.msra.mxu0 0.0
        %371 = vmatprep.subr.mxu0 0.0
        %372 = vmatpush1.msra.mxu0 0.0
        %373 = vmatprep.subr.mxu0 0.0
        %374 = vmatpush1.msra.mxu0 0.0
        %375 = vmatprep.subr.mxu0 0.0
        %376 = vmatpush1.msra.mxu0 0.0
        %377 = vmatprep.subr.mxu0 0.0
        %378 = vmatpush1.msra.mxu0 0.0
        %379 = vmatprep.subr.mxu0 0.0
        %380 = vmatpush1.msra.mxu0 0.0
        %381 = vmatprep.subr.mxu0 0.0
        %382 = vmatpush1.msra.mxu0 0.0
        %383 = vmatprep.subr.mxu0 0.0
        %384 = vmatpush1.msra.mxu0 0.0
        %385 = vmatprep.subr.mxu0 0.0
        %386 = vmatpush1.msra.mxu0 0.0
        %387 = vmatprep.subr.mxu0 0.0
        %388 = vmatpush1.msra.mxu0 0.0
        %389 = vmatprep.subr.mxu0 0.0
        %390 = vmatpush1.msra.mxu0 0.0
        %391 = vmatprep.subr.mxu0 0.0
        %392 = vmatpush1.msra.mxu0 0.0
        %393 = vmatprep.subr.mxu0 0.0
        %394 = vmatpush1.msra.mxu0 0.0
        %395 = vmatprep.subr.mxu0 0.0
        %396 = vmatpush1.msra.mxu0 0.0
        %397 = vmatprep.subr.mxu0 0.0
        %398 = vmatpush1.msra.mxu0 0.0
        %399 = vmatprep.subr.mxu0 0.0
        %400 = vmatpush1.msra.mxu0 0.0
        %401 = vmatprep.subr.mxu0 0.0
        %402 = vmatpush1.msra.mxu0 0.0
        %403 = vmatprep.mubr.f32.mxu0 0.0
        %404 = vmatmul.mubr.f32.gmra.mrb[0].mxu0 %v311
        %v405 = vpop.f32.mrb[0].mxu0
        %v406 = vadd.f32 %v256, %v405
        %v407 = vpop.f32.mrb[0].mxu0
        %v408 = vadd.f32 %v256, %v407
        %409 = vmatprep.mubr.f32.mxu0 0.0
        %410 = vmatmul.mubr.f32.gmra.mrb[0].mxu0 %v314
        %v411 = vpop.f32.mrb[0].mxu0
        %v412 = vadd.f32 %v261, %v411
        %v413 = vpop.f32.mrb[0].mxu0
        %v414 = vadd.f32 %v261, %v413
        %415 = vmatprep.mubr.f32.mxu0 0.0
        %416 = vmatmul.mubr.f32.gmra.mrb[0].mxu0 %v317
        %v417 = vpop.f32.mrb[0].mxu0
        %v418 = vadd.f32 %v266, %v417
        %v419 = vpop.f32.mrb[0].mxu0
        %v420 = vadd.f32 %v266, %v419
        %421 = vmatprep.mubr.f32.mxu0 0.0
        %422 = vmatmul.mubr.f32.gmra.mrb[0].mxu0 %v320
        %v423 = vpop.f32.mrb[0].mxu0
        %v424 = vadd.f32 %v271, %v423
        %v425 = vpop.f32.mrb[0].mxu0
        %v426 = vadd.f32 %v271, %v425
        %427 = vdwg.mxu0
        %428 = vmatprep.subr.mxu0 %v329
        %429 = vmatpush1.msra.mxu0 %v327
        %430 = vmatprep.subr.mxu0 0.0
        %431 = vmatpush1.msra.mxu0 0.0
        %432 = vmatprep.subr.mxu0 0.0
        %433 = vmatpush1.msra.mxu0 0.0
        %434 = vmatprep.subr.mxu0 0.0
        %435 = vmatpush1.msra.mxu0 0.0
        %436 = vmatprep.subr.mxu0 0.0
        %437 = vmatpush1.msra.mxu0 0.0
        %438 = vmatprep.subr.mxu0 0.0
        %439 = vmatpush1.msra.mxu0 0.0
        %440 = vmatprep.subr.mxu0 0.0
        %441 = vmatpush1.msra.mxu0 0.0
        %442 = vmatprep.subr.mxu0 0.0
        %443 = vmatpush1.msra.mxu0 0.0
        %444 = vmatprep.subr.mxu0 0.0
        %445 = vmatpush1.msra.mxu0 0.0
        %446 = vmatprep.subr.mxu0 0.0
        %447 = vmatpush1.msra.mxu0 0.0
        %448 = vmatprep.subr.mxu0 0.0
        %449 = vmatpush1.msra.mxu0 0.0
        %450 = vmatprep.subr.mxu0 0.0
        %451 = vmatpush1.msra.mxu0 0.0
        %452 = vmatprep.subr.mxu0 0.0
        %453 = vmatpush1.msra.mxu0 0.0
        %454 = vmatprep.subr.mxu0 0.0
        %455 = vmatpush1.msra.mxu0 0.0
        %456 = vmatprep.subr.mxu0 0.0
        %457 = vmatpush1.msra.mxu0 0.0
        %458 = vmatprep.subr.mxu0 0.0
        %459 = vmatpush1.msra.mxu0 0.0
        %460 = vmatprep.subr.mxu0 0.0
        %461 = vmatpush1.msra.mxu0 0.0
        %462 = vmatprep.subr.mxu0 0.0
        %463 = vmatpush1.msra.mxu0 0.0
        %464 = vmatprep.subr.mxu0 0.0
        %465 = vmatpush1.msra.mxu0 0.0
        %466 = vmatprep.subr.mxu0 0.0
        %467 = vmatpush1.msra.mxu0 0.0
        %468 = vmatprep.subr.mxu0 0.0
        %469 = vmatpush1.msra.mxu0 0.0
        %470 = vmatprep.subr.mxu0 0.0
        %471 = vmatpush1.msra.mxu0 0.0
        %472 = vmatprep.subr.mxu0 0.0
        %473 = vmatpush1.msra.mxu0 0.0
        %474 = vmatprep.subr.mxu0 0.0
        %475 = vmatpush1.msra.mxu0 0.0
        %476 = vmatprep.subr.mxu0 0.0
        %477 = vmatpush1.msra.mxu0 0.0
        %478 = vmatprep.subr.mxu0 0.0
        %479 = vmatpush1.msra.mxu0 0.0
        %480 = vmatprep.subr.mxu0 0.0
        %481 = vmatpush1.msra.mxu0 0.0
        %482 = vmatprep.subr.mxu0 0.0
        %483 = vmatpush1.msra.mxu0 0.0
        %484 = vmatprep.subr.mxu0 0.0
        %485 = vmatpush1.msra.mxu0 0.0
        %486 = vmatprep.subr.mxu0 0.0
        %487 = vmatpush1.msra.mxu0 0.0
        %488 = vmatprep.subr.mxu0 0.0
        %489 = vmatpush1.msra.mxu0 0.0
        %490 = vmatprep.subr.mxu0 0.0
        %491 = vmatpush1.msra.mxu0 0.0
        %492 = vmatprep.mubr.f32.mxu0 0.0
        %493 = vmatmul.mubr.f32.gmra.mrb[0].mxu0 %v311
        %v494 = vpop.f32.mrb[0].mxu0
        %v495 = vadd.f32 %v256, %v494
        %v496 = vpop.f32.mrb[0].mxu0
        %v497 = vadd.f32 %v256, %v496
        %498 = vmatprep.mubr.f32.mxu0 0.0
        %499 = vmatmul.mubr.f32.gmra.mrb[0].mxu0 %v314
        %v500 = vpop.f32.mrb[0].mxu0
        %v501 = vadd.f32 %v261, %v500
        %v502 = vpop.f32.mrb[0].mxu0
        %v503 = vadd.f32 %v261, %v502
        %504 = vmatprep.mubr.f32.mxu0 0.0
        %505 = vmatmul.mubr.f32.gmra.mrb[0].mxu0 %v317
        %v506 = vpop.f32.mrb[0].mxu0
        %v507 = vadd.f32 %v266, %v506
        %v508 = vpop.f32.mrb[0].mxu0
        %v509 = vadd.f32 %v266, %v508
        %510 = vmatprep.mubr.f32.mxu0 0.0
        %511 = vmatmul.mubr.f32.gmra.mrb[0].mxu0 %v320
        %v512 = vpop.f32.mrb[0].mxu0
        %v513 = vadd.f32 %v271, %v512
        %v514 = vpop.f32.mrb[0].mxu0
        %v515 = vadd.f32 %v271, %v514
        %516 = vdwg.mxu0
        %517 = vmatprep.subr.mxu0 %v333
        %518 = vmatpush1.msra.mxu0 %v331
        %519 = vmatprep.subr.mxu0 0.0
        %520 = vmatpush1.msra.mxu0 0.0
        %521 = vmatprep.subr.mxu0 0.0
        %522 = vmatpush1.msra.mxu0 0.0
        %523 = vmatprep.subr.mxu0 0.0
        %524 = vmatpush1.msra.mxu0 0.0
        %525 = vmatprep.subr.mxu0 0.0
        %526 = vmatpush1.msra.mxu0 0.0
        %527 = vmatprep.subr.mxu0 0.0
        %528 = vmatpush1.msra.mxu0 0.0
        %529 = vmatprep.subr.mxu0 0.0
        %530 = vmatpush1.msra.mxu0 0.0
        %531 = vmatprep.subr.mxu0 0.0
        %532 = vmatpush1.msra.mxu0 0.0
        %533 = vmatprep.subr.mxu0 0.0
        %534 = vmatpush1.msra.mxu0 0.0
        %535 = vmatprep.subr.mxu0 0.0
        %536 = vmatpush1.msra.mxu0 0.0
        %537 = vmatprep.subr.mxu0 0.0
        %538 = vmatpush1.msra.mxu0 0.0
        %539 = vmatprep.subr.mxu0 0.0
        %540 = vmatpush1.msra.mxu0 0.0
        %541 = vmatprep.subr.mxu0 0.0
        %542 = vmatpush1.msra.mxu0 0.0
        %543 = vmatprep.subr.mxu0 0.0
        %544 = vmatpush1.msra.mxu0 0.0
        %545 = vmatprep.subr.mxu0 0.0
        %546 = vmatpush1.msra.mxu0 0.0
        %547 = vmatprep.subr.mxu0 0.0
        %548 = vmatpush1.msra.mxu0 0.0
        %549 = vmatprep.subr.mxu0 0.0
        %550 = vmatpush1.msra.mxu0 0.0
        %551 = vmatprep.subr.mxu0 0.0
        %552 = vmatpush1.msra.mxu0 0.0
        %553 = vmatprep.subr.mxu0 0.0
        %554 = vmatpush1.msra.mxu0 0.0
        %555 = vmatprep.subr.mxu0 0.0
        %556 = vmatpush1.msra.mxu0 0.0
        %557 = vmatprep.subr.mxu0 0.0
        %558 = vmatpush1.msra.mxu0 0.0
        %559 = vmatprep.subr.mxu0 0.0
        %560 = vmatpush1.msra.mxu0 0.0
        %561 = vmatprep.subr.mxu0 0.0
        %562 = vmatpush1.msra.mxu0 0.0
        %563 = vmatprep.subr.mxu0 0.0
        %564 = vmatpush1.msra.mxu0 0.0
        %565 = vmatprep.subr.mxu0 0.0
        %566 = vmatpush1.msra.mxu0 0.0
        %567 = vmatprep.subr.mxu0 0.0
        %568 = vmatpush1.msra.mxu0 0.0
        %569 = vmatprep.subr.mxu0 0.0
        %570 = vmatpush1.msra.mxu0 0.0
        %571 = vmatprep.subr.mxu0 0.0
        %572 = vmatpush1.msra.mxu0 0.0
        %573 = vmatprep.subr.mxu0 0.0
        %574 = vmatpush1.msra.mxu0 0.0
        %575 = vmatprep.subr.mxu0 0.0
        %576 = vmatpush1.msra.mxu0 0.0
        %577 = vmatprep.subr.mxu0 0.0
        %578 = vmatpush1.msra.mxu0 0.0
        %579 = vmatprep.subr.mxu0 0.0
        %580 = vmatpush1.msra.mxu0 0.0
        %581 = vmatprep.mubr.f32.mxu0 0.0
        %582 = vmatmul.mubr.f32.gmra.mrb[0].mxu0 %v311
        %v583 = vpop.f32.mrb[0].mxu0
        %v584 = vadd.f32 %v256, %v583
        %v585 = vpop.f32.mrb[0].mxu0
        %v586 = vadd.f32 %v256, %v585
        %587 = vmatprep.mubr.f32.mxu0 0.0
        %588 = vmatmul.mubr.f32.gmra.mrb[0].mxu0 %v314
        %v589 = vpop.f32.mrb[0].mxu0
        %v590 = vadd.f32 %v261, %v589
        %v591 = vpop.f32.mrb[0].mxu0
        %v592 = vadd.f32 %v261, %v591
        %593 = vmatprep.mubr.f32.mxu0 0.0
        %594 = vmatmul.mubr.f32.gmra.mrb[0].mxu0 %v317
        %v595 = vpop.f32.mrb[0].mxu0
        %v596 = vadd.f32 %v266, %v595
        %v597 = vpop.f32.mrb[0].mxu0
        %v598 = vadd.f32 %v266, %v597
        %599 = vmatprep.mubr.f32.mxu0 0.0
        %600 = vmatmul.mubr.f32.gmra.mrb[0].mxu0 %v320
        %v601 = vpop.f32.mrb[0].mxu0
        %v602 = vadd.f32 %v271, %v601
        %v603 = vpop.f32.mrb[0].mxu0
        %v604 = vadd.f32 %v271, %v603
        %605 = vdwg.mxu0
        %606 = vmatprep.subr.mxu0 %v337
        %607 = vmatpush1.msra.mxu0 %v335
        %608 = vmatprep.subr.mxu0 0.0
        %609 = vmatpush1.msra.mxu0 0.0
        %610 = vmatprep.subr.mxu0 0.0
        %611 = vmatpush1.msra.mxu0 0.0
        %612 = vmatprep.subr.mxu0 0.0
        %613 = vmatpush1.msra.mxu0 0.0
        %614 = vmatprep.subr.mxu0 0.0
        %615 = vmatpush1.msra.mxu0 0.0
        %616 = vmatprep.subr.mxu0 0.0
        %617 = vmatpush1.msra.mxu0 0.0
        %618 = vmatprep.subr.mxu0 0.0
        %619 = vmatpush1.msra.mxu0 0.0
        %620 = vmatprep.subr.mxu0 0.0
        %621 = vmatpush1.msra.mxu0 0.0
        %622 = vmatprep.subr.mxu0 0.0
        %623 = vmatpush1.msra.mxu0 0.0
        %624 = vmatprep.subr.mxu0 0.0
        %625 = vmatpush1.msra.mxu0 0.0
        %626 = vmatprep.subr.mxu0 0.0
        %627 = vmatpush1.msra.mxu0 0.0
        %628 = vmatprep.subr.mxu0 0.0
        %629 = vmatpush1.msra.mxu0 0.0
        %630 = vmatprep.subr.mxu0 0.0
        %631 = vmatpush1.msra.mxu0 0.0
        %632 = vmatprep.subr.mxu0 0.0
        %633 = vmatpush1.msra.mxu0 0.0
        %634 = vmatprep.subr.mxu0 0.0
        %635 = vmatpush1.msra.mxu0 0.0
        %636 = vmatprep.subr.mxu0 0.0
        %637 = vmatpush1.msra.mxu0 0.0
        %638 = vmatprep.subr.mxu0 0.0
        %639 = vmatpush1.msra.mxu0 0.0
        %640 = vmatprep.subr.mxu0 0.0
        %641 = vmatpush1.msra.mxu0 0.0
        %642 = vmatprep.subr.mxu0 0.0
        %643 = vmatpush1.msra.mxu0 0.0
        %644 = vmatprep.subr.mxu0 0.0
        %645 = vmatpush1.msra.mxu0 0.0
        %646 = vmatprep.subr.mxu0 0.0
        %647 = vmatpush1.msra.mxu0 0.0
        %648 = vmatprep.subr.mxu0 0.0
        %649 = vmatpush1.msra.mxu0 0.0
        %650 = vmatprep.subr.mxu0 0.0
        %651 = vmatpush1.msra.mxu0 0.0
        %652 = vmatprep.subr.mxu0 0.0
        %653 = vmatpush1.msra.mxu0 0.0
        %654 = vmatprep.subr.mxu0 0.0
        %655 = vmatpush1.msra.mxu0 0.0
        %656 = vmatprep.subr.mxu0 0.0
        %657 = vmatpush1.msra.mxu0 0.0
        %658 = vmatprep.subr.mxu0 0.0
        %659 = vmatpush1.msra.mxu0 0.0
        %660 = vmatprep.subr.mxu0 0.0
        %661 = vmatpush1.msra.mxu0 0.0
        %662 = vmatprep.subr.mxu0 0.0
        %663 = vmatpush1.msra.mxu0 0.0
        %664 = vmatprep.subr.mxu0 0.0
        %665 = vmatpush1.msra.mxu0 0.0
        %666 = vmatprep.subr.mxu0 0.0
        %667 = vmatpush1.msra.mxu0 0.0
        %668 = vmatprep.subr.mxu0 0.0
        %669 = vmatpush1.msra.mxu0 0.0
        %670 = vmatprep.mubr.f32.mxu0 0.0
        %671 = vmatmul.mubr.f32.gmra.mrb[0].mxu0 %v311
        %v672 = vpop.f32.mrb[0].mxu0
        %v673 = vadd.f32 %v256, %v672
        %v674 = vpop.f32.mrb[0].mxu0
        %v675 = vadd.f32 %v256, %v674
        %676 = vmatprep.mubr.f32.mxu0 0.0
        %677 = vmatmul.mubr.f32.gmra.mrb[0].mxu0 %v314
        %v678 = vpop.f32.mrb[0].mxu0
        %v679 = vadd.f32 %v261, %v678
        %v680 = vpop.f32.mrb[0].mxu0
        %v681 = vadd.f32 %v261, %v680
        %682 = vmatprep.mubr.f32.mxu0 0.0
        %683 = vmatmul.mubr.f32.gmra.mrb[0].mxu0 %v317
        %v684 = vpop.f32.mrb[0].mxu0
        %v685 = vadd.f32 %v266, %v684
        %v686 = vpop.f32.mrb[0].mxu0
        %v687 = vadd.f32 %v266, %v686
        %688 = vmatprep.mubr.f32.mxu0 0.0
        %689 = vmatmul.mubr.f32.gmra.mrb[0].mxu0 %v320
        %v690 = vpop.f32.mrb[0].mxu0
        %v691 = vadd.f32 %v271, %v690
        %v692 = vpop.f32.mrb[0].mxu0
        %v693 = vadd.f32 %v271, %v692
        %694 = vdwg.mxu0
        %v695 = vtanh.pop %v406
        %v696 = vtanh.pop %v408
        %v697 = vtanh.pop %v495
        %v698 = vtanh.pop %v497
        %v699 = vtanh.pop %v584
        %v700 = vtanh.pop %v586
        %v701 = vtanh.pop %v673
        %v702 = vtanh.pop %v675
        %v703 = vtanh.pop %v412
        %v704 = vtanh.pop %v414
        %v705 = vtanh.pop %v501
        %v706 = vtanh.pop %v503
        %v707 = vtanh.pop %v590
        %v708 = vtanh.pop %v592
        %v709 = vtanh.pop %v679
        %v710 = vtanh.pop %v681
        %v711 = vtanh.pop %v418
        %v712 = vtanh.pop %v420
        %v713 = vtanh.pop %v507
        %v714 = vtanh.pop %v509
        %v715 = vtanh.pop %v596
        %v716 = vtanh.pop %v598
        %v717 = vtanh.pop %v685
        %v718 = vtanh.pop %v687
        %v719 = vtanh.pop %v424
        %v720 = vtanh.pop %v426
        %v721 = vtanh.pop %v513
        %v722 = vtanh.pop %v515
        %v723 = vtanh.pop %v602
        %v724 = vtanh.pop %v604
        %v725 = vtanh.pop %v691
        %v726 = vtanh.pop %v693
        %728 = vset.pattern.permute.xlu0 0
        %729 = vperm.xlu0 %728, %v232
        %v730 = vpop.permute.xlu0 %729
        %733 = vset.pattern.permute.xlu0 0
        %734 = vperm.xlu0 %733, %v233
        %v735 = vpop.permute.xlu0 %734
        %738 = vset.pattern.permute.xlu0 0
        %739 = vperm.xlu0 %738, %v234
        %v740 = vpop.permute.xlu0 %739
        %743 = vset.pattern.permute.xlu0 0
        %744 = vperm.xlu0 %743, %v235
        %v745 = vpop.permute.xlu0 %744
        %vm747 = vcmask 261120
        %v749 = vsel %vm747, %v241, 0
        %v752 = vsel %vm747, %v242, 0
        %v755 = vsel %vm747, %v243, 0
        %v758 = vsel %vm747, %v244, 0
        %760 = vmatprep.subr.mxu0 %v696
        %761 = vmatpush1.msra.mxu0 %v695
        %762 = vmatprep.subr.mxu0 %v704
        %763 = vmatpush1.msra.mxu0 %v703
        %764 = vmatprep.subr.mxu0 %v712
        %765 = vmatpush1.msra.mxu0 %v711
        %766 = vmatprep.subr.mxu0 %v720
        %767 = vmatpush1.msra.mxu0 %v719
        %768 = vmatprep.subr.mxu0 0.0
        %769 = vmatpush1.msra.mxu0 0.0
        %770 = vmatprep.subr.mxu0 0.0
        %771 = vmatpush1.msra.mxu0 0.0
        %772 = vmatprep.subr.mxu0 0.0
        %773 = vmatpush1.msra.mxu0 0.0
        %774 = vmatprep.subr.mxu0 0.0
        %775 = vmatpush1.msra.mxu0 0.0
        %776 = vmatprep.subr.mxu0 0.0
        %777 = vmatpush1.msra.mxu0 0.0
        %778 = vmatprep.subr.mxu0 0.0
        %779 = vmatpush1.msra.mxu0 0.0
        %780 = vmatprep.subr.mxu0 0.0
        %781 = vmatpush1.msra.mxu0 0.0
        %782 = vmatprep.subr.mxu0 0.0
        %783 = vmatpush1.msra.mxu0 0.0
        %784 = vmatprep.subr.mxu0 0.0
        %785 = vmatpush1.msra.mxu0 0.0
        %786 = vmatprep.subr.mxu0 0.0
        %787 = vmatpush1.msra.mxu0 0.0
        %788 = vmatprep.subr.mxu0 0.0
        %789 = vmatpush1.msra.mxu0 0.0
        %790 = vmatprep.subr.mxu0 0.0
        %791 = vmatpush1.msra.mxu0 0.0
        %792 = vmatprep.subr.mxu0 0.0
        %793 = vmatpush1.msra.mxu0 0.0
        %794 = vmatprep.subr.mxu0 0.0
        %795 = vmatpush1.msra.mxu0 0.0
        %796 = vmatprep.subr.mxu0 0.0
        %797 = vmatpush1.msra.mxu0 0.0
        %798 = vmatprep.subr.mxu0 0.0
        %799 = vmatpush1.msra.mxu0 0.0
        %800 = vmatprep.subr.mxu0 0.0
        %801 = vmatpush1.msra.mxu0 0.0
        %802 = vmatprep.subr.mxu0 0.0
        %803 = vmatpush1.msra.mxu0 0.0
        %804 = vmatprep.subr.mxu0 0.0
        %805 = vmatpush1.msra.mxu0 0.0
        %806 = vmatprep.subr.mxu0 0.0
        %807 = vmatpush1.msra.mxu0 0.0
        %808 = vmatprep.subr.mxu0 0.0
        %809 = vmatpush1.msra.mxu0 0.0
        %810 = vmatprep.subr.mxu0 0.0
        %811 = vmatpush1.msra.mxu0 0.0
        %812 = vmatprep.subr.mxu0 0.0
        %813 = vmatpush1.msra.mxu0 0.0
        %814 = vmatprep.subr.mxu0 0.0
        %815 = vmatpush1.msra.mxu0 0.0
        %816 = vmatprep.subr.mxu0 0.0
        %817 = vmatpush1.msra.mxu0 0.0
        %818 = vmatprep.subr.mxu0 0.0
        %819 = vmatpush1.msra.mxu0 0.0
        %820 = vmatprep.subr.mxu0 0.0
        %821 = vmatpush1.msra.mxu0 0.0
        %822 = vmatprep.subr.mxu0 0.0
        %823 = vmatpush1.msra.mxu0 0.0
        %824 = vmatprep.mubr.f32.mxu0 0.0
        %825 = vmatmul.mubr.f32.gmra.mrb[0].mxu0 %v749
        %v826 = vpop.f32.mrb[0].mxu0
        %v827 = vadd.f32 %v730, %v826
        %v828 = vpop.f32.mrb[0].mxu0
        %v829 = vadd.f32 %v730, %v828
        %830 = vmatprep.mubr.f32.mxu0 0.0
        %831 = vmatmul.mubr.f32.gmra.mrb[0].mxu0 %v752
        %v832 = vpop.f32.mrb[0].mxu0
        %v833 = vadd.f32 %v735, %v832
        %v834 = vpop.f32.mrb[0].mxu0
        %v835 = vadd.f32 %v735, %v834
        %836 = vmatprep.mubr.f32.mxu0 0.0
        %837 = vmatmul.mubr.f32.gmra.mrb[0].mxu0 %v755
        %v838 = vpop.f32.mrb[0].mxu0
        %v839 = vadd.f32 %v740, %v838
        %v840 = vpop.f32.mrb[0].mxu0
        %v841 = vadd.f32 %v740, %v840
        %842 = vmatprep.mubr.f32.mxu0 0.0
        %843 = vmatmul.mubr.f32.gmra.mrb[0].mxu0 %v758
        %v844 = vpop.f32.mrb[0].mxu0
        %v845 = vadd.f32 %v745, %v844
        %v846 = vpop.f32.mrb[0].mxu0
        %v847 = vadd.f32 %v745, %v846
        %848 = vdwg.mxu0
        %849 = vmatprep.subr.mxu0 %v698
        %850 = vmatpush1.msra.mxu0 %v697
        %851 = vmatprep.subr.mxu0 %v706
        %852 = vmatpush1.msra.mxu0 %v705
        %853 = vmatprep.subr.mxu0 %v714
        %854 = vmatpush1.msra.mxu0 %v713
        %855 = vmatprep.subr.mxu0 %v722
        %856 = vmatpush1.msra.mxu0 %v721
        %857 = vmatprep.subr.mxu0 0.0
        %858 = vmatpush1.msra.mxu0 0.0
        %859 = vmatprep.subr.mxu0 0.0
        %860 = vmatpush1.msra.mxu0 0.0
        %861 = vmatprep.subr.mxu0 0.0
        %862 = vmatpush1.msra.mxu0 0.0
        %863 = vmatprep.subr.mxu0 0.0
        %864 = vmatpush1.msra.mxu0 0.0
        %865 = vmatprep.subr.mxu0 0.0
        %866 = vmatpush1.msra.mxu0 0.0
        %867 = vmatprep.subr.mxu0 0.0
        %868 = vmatpush1.msra.mxu0 0.0
        %869 = vmatprep.subr.mxu0 0.0
        %870 = vmatpush1.msra.mxu0 0.0
        %871 = vmatprep.subr.mxu0 0.0
        %872 = vmatpush1.msra.mxu0 0.0
        %873 = vmatprep.subr.mxu0 0.0
        %874 = vmatpush1.msra.mxu0 0.0
        %875 = vmatprep.subr.mxu0 0.0
        %876 = vmatpush1.msra.mxu0 0.0
        %877 = vmatprep.subr.mxu0 0.0
        %878 = vmatpush1.msra.mxu0 0.0
        %879 = vmatprep.subr.mxu0 0.0
        %880 = vmatpush1.msra.mxu0 0.0
        %881 = vmatprep.subr.mxu0 0.0
        %882 = vmatpush1.msra.mxu0 0.0
        %883 = vmatprep.subr.mxu0 0.0
        %884 = vmatpush1.msra.mxu0 0.0
        %885 = vmatprep.subr.mxu0 0.0
        %886 = vmatpush1.msra.mxu0 0.0
        %887 = vmatprep.subr.mxu0 0.0
        %888 = vmatpush1.msra.mxu0 0.0
        %889 = vmatprep.subr.mxu0 0.0
        %890 = vmatpush1.msra.mxu0 0.0
        %891 = vmatprep.subr.mxu0 0.0
        %892 = vmatpush1.msra.mxu0 0.0
        %893 = vmatprep.subr.mxu0 0.0
        %894 = vmatpush1.msra.mxu0 0.0
        %895 = vmatprep.subr.mxu0 0.0
        %896 = vmatpush1.msra.mxu0 0.0
        %897 = vmatprep.subr.mxu0 0.0
        %898 = vmatpush1.msra.mxu0 0.0
        %899 = vmatprep.subr.mxu0 0.0
        %900 = vmatpush1.msra.mxu0 0.0
        %901 = vmatprep.subr.mxu0 0.0
        %902 = vmatpush1.msra.mxu0 0.0
        %903 = vmatprep.subr.mxu0 0.0
        %904 = vmatpush1.msra.mxu0 0.0
        %905 = vmatprep.subr.mxu0 0.0
        %906 = vmatpush1.msra.mxu0 0.0
        %907 = vmatprep.subr.mxu0 0.0
        %908 = vmatpush1.msra.mxu0 0.0
        %909 = vmatprep.subr.mxu0 0.0
        %910 = vmatpush1.msra.mxu0 0.0
        %911 = vmatprep.subr.mxu0 0.0
        %912 = vmatpush1.msra.mxu0 0.0
        %913 = vmatprep.mubr.f32.mxu0 0.0
        %914 = vmatmul.mubr.f32.gmra.mrb[0].mxu0 %v749
        %v915 = vpop.f32.mrb[0].mxu0
        %v916 = vadd.f32 %v730, %v915
        %v917 = vpop.f32.mrb[0].mxu0
        %v918 = vadd.f32 %v730, %v917
        %919 = vmatprep.mubr.f32.mxu0 0.0
        %920 = vmatmul.mubr.f32.gmra.mrb[0].mxu0 %v752
        %v921 = vpop.f32.mrb[0].mxu0
        %v922 = vadd.f32 %v735, %v921
        %v923 = vpop.f32.mrb[0].mxu0
        %v924 = vadd.f32 %v735, %v923
        %925 = vmatprep.mubr.f32.mxu0 0.0
        %926 = vmatmul.mubr.f32.gmra.mrb[0].mxu0 %v755
        %v927 = vpop.f32.mrb[0].mxu0
        %v928 = vadd.f32 %v740, %v927
        %v929 = vpop.f32.mrb[0].mxu0
        %v930 = vadd.f32 %v740, %v929
        %931 = vmatprep.mubr.f32.mxu0 0.0
        %932 = vmatmul.mubr.f32.gmra.mrb[0].mxu0 %v758
        %v933 = vpop.f32.mrb[0].mxu0
        %v934 = vadd.f32 %v745, %v933
        %v935 = vpop.f32.mrb[0].mxu0
        %v936 = vadd.f32 %v745, %v935
        %937 = vdwg.mxu0
        %938 = vmatprep.subr.mxu0 %v700
        %939 = vmatpush1.msra.mxu0 %v699
        %940 = vmatprep.subr.mxu0 %v708
        %941 = vmatpush1.msra.mxu0 %v707
        %942 = vmatprep.subr.mxu0 %v716
        %943 = vmatpush1.msra.mxu0 %v715
        %944 = vmatprep.subr.mxu0 %v724
        %945 = vmatpush1.msra.mxu0 %v723
        %946 = vmatprep.subr.mxu0 0.0
        %947 = vmatpush1.msra.mxu0 0.0
        %948 = vmatprep.subr.mxu0 0.0
        %949 = vmatpush1.msra.mxu0 0.0
        %950 = vmatprep.subr.mxu0 0.0
        %951 = vmatpush1.msra.mxu0 0.0
        %952 = vmatprep.subr.mxu0 0.0
        %953 = vmatpush1.msra.mxu0 0.0
        %954 = vmatprep.subr.mxu0 0.0
        %955 = vmatpush1.msra.mxu0 0.0
        %956 = vmatprep.subr.mxu0 0.0
        %957 = vmatpush1.msra.mxu0 0.0
        %958 = vmatprep.subr.mxu0 0.0
        %959 = vmatpush1.msra.mxu0 0.0
        %960 = vmatprep.subr.mxu0 0.0
        %961 = vmatpush1.msra.mxu0 0.0
        %962 = vmatprep.subr.mxu0 0.0
        %963 = vmatpush1.msra.mxu0 0.0
        %964 = vmatprep.subr.mxu0 0.0
        %965 = vmatpush1.msra.mxu0 0.0
        %966 = vmatprep.subr.mxu0 0.0
        %967 = vmatpush1.msra.mxu0 0.0
        %968 = vmatprep.subr.mxu0 0.0
        %969 = vmatpush1.msra.mxu0 0.0
        %970 = vmatprep.subr.mxu0 0.0
        %971 = vmatpush1.msra.mxu0 0.0
        %972 = vmatprep.subr.mxu0 0.0
        %973 = vmatpush1.msra.mxu0 0.0
        %974 = vmatprep.subr.mxu0 0.0
        %975 = vmatpush1.msra.mxu0 0.0
        %976 = vmatprep.subr.mxu0 0.0
        %977 = vmatpush1.msra.mxu0 0.0
        %978 = vmatprep.subr.mxu0 0.0
        %979 = vmatpush1.msra.mxu0 0.0
        %980 = vmatprep.subr.mxu0 0.0
        %981 = vmatpush1.msra.mxu0 0.0
        %982 = vmatprep.subr.mxu0 0.0
        %983 = vmatpush1.msra.mxu0 0.0
        %984 = vmatprep.subr.mxu0 0.0
        %985 = vmatpush1.msra.mxu0 0.0
        %986 = vmatprep.subr.mxu0 0.0
        %987 = vmatpush1.msra.mxu0 0.0
        %988 = vmatprep.subr.mxu0 0.0
        %989 = vmatpush1.msra.mxu0 0.0
        %990 = vmatprep.subr.mxu0 0.0
        %991 = vmatpush1.msra.mxu0 0.0
        %992 = vmatprep.subr.mxu0 0.0
        %993 = vmatpush1.msra.mxu0 0.0
        %994 = vmatprep.subr.mxu0 0.0
        %995 = vmatpush1.msra.mxu0 0.0
        %996 = vmatprep.subr.mxu0 0.0
        %997 = vmatpush1.msra.mxu0 0.0
        %998 = vmatprep.subr.mxu0 0.0
        %999 = vmatpush1.msra.mxu0 0.0
        %1000 = vmatprep.subr.mxu0 0.0
        %1001 = vmatpush1.msra.mxu0 0.0
        %1002 = vmatprep.mubr.f32.mxu0 0.0
        %1003 = vmatmul.mubr.f32.gmra.mrb[0].mxu0 %v749
        %v1004 = vpop.f32.mrb[0].mxu0
        %v1005 = vadd.f32 %v730, %v1004
        %v1006 = vpop.f32.mrb[0].mxu0
        %v1007 = vadd.f32 %v730, %v1006
        %1008 = vmatprep.mubr.f32.mxu0 0.0
        %1009 = vmatmul.mubr.f32.gmra.mrb[0].mxu0 %v752
        %v1010 = vpop.f32.mrb[0].mxu0
        %v1011 = vadd.f32 %v735, %v1010
        %v1012 = vpop.f32.mrb[0].mxu0
        %v1013 = vadd.f32 %v735, %v1012
        %1014 = vmatprep.mubr.f32.mxu0 0.0
        %1015 = vmatmul.mubr.f32.gmra.mrb[0].mxu0 %v755
        %v1016 = vpop.f32.mrb[0].mxu0
        %v1017 = vadd.f32 %v740, %v1016
        %v1018 = vpop.f32.mrb[0].mxu0
        %v1019 = vadd.f32 %v740, %v1018
        %1020 = vmatprep.mubr.f32.mxu0 0.0
        %1021 = vmatmul.mubr.f32.gmra.mrb[0].mxu0 %v758
        %v1022 = vpop.f32.mrb[0].mxu0
        %v1023 = vadd.f32 %v745, %v1022
        %v1024 = vpop.f32.mrb[0].mxu0
        %v1025 = vadd.f32 %v745, %v1024
        %1026 = vdwg.mxu0
        %1027 = vmatprep.subr.mxu0 %v702
        %1028 = vmatpush1.msra.mxu0 %v701
        %1029 = vmatprep.subr.mxu0 %v710
        %1030 = vmatpush1.msra.mxu0 %v709
        %1031 = vmatprep.subr.mxu0 %v718
        %1032 = vmatpush1.msra.mxu0 %v717
        %1033 = vmatprep.subr.mxu0 %v726
        %1034 = vmatpush1.msra.mxu0 %v725
        %1035 = vmatprep.subr.mxu0 0.0
        %1036 = vmatpush1.msra.mxu0 0.0
        %1037 = vmatprep.subr.mxu0 0.0
        %1038 = vmatpush1.msra.mxu0 0.0
        %1039 = vmatprep.subr.mxu0 0.0
        %1040 = vmatpush1.msra.mxu0 0.0
        %1041 = vmatprep.subr.mxu0 0.0
        %1042 = vmatpush1.msra.mxu0 0.0
        %1043 = vmatprep.subr.mxu0 0.0
        %1044 = vmatpush1.msra.mxu0 0.0
        %1045 = vmatprep.subr.mxu0 0.0
        %1046 = vmatpush1.msra.mxu0 0.0
        %1047 = vmatprep.subr.mxu0 0.0
        %1048 = vmatpush1.msra.mxu0 0.0
        %1049 = vmatprep.subr.mxu0 0.0
        %1050 = vmatpush1.msra.mxu0 0.0
        %1051 = vmatprep.subr.mxu0 0.0
        %1052 = vmatpush1.msra.mxu0 0.0
        %1053 = vmatprep.subr.mxu0 0.0
        %1054 = vmatpush1.msra.mxu0 0.0
        %1055 = vmatprep.subr.mxu0 0.0
        %1056 = vmatpush1.msra.mxu0 0.0
        %1057 = vmatprep.subr.mxu0 0.0
        %1058 = vmatpush1.msra.mxu0 0.0
        %1059 = vmatprep.subr.mxu0 0.0
        %1060 = vmatpush1.msra.mxu0 0.0
        %1061 = vmatprep.subr.mxu0 0.0
        %1062 = vmatpush1.msra.mxu0 0.0
        %1063 = vmatprep.subr.mxu0 0.0
        %1064 = vmatpush1.msra.mxu0 0.0
        %1065 = vmatprep.subr.mxu0 0.0
        %1066 = vmatpush1.msra.mxu0 0.0
        %1067 = vmatprep.subr.mxu0 0.0
        %1068 = vmatpush1.msra.mxu0 0.0
        %1069 = vmatprep.subr.mxu0 0.0
        %1070 = vmatpush1.msra.mxu0 0.0
        %1071 = vmatprep.subr.mxu0 0.0
        %1072 = vmatpush1.msra.mxu0 0.0
        %1073 = vmatprep.subr.mxu0 0.0
        %1074 = vmatpush1.msra.mxu0 0.0
        %1075 = vmatprep.subr.mxu0 0.0
        %1076 = vmatpush1.msra.mxu0 0.0
        %1077 = vmatprep.subr.mxu0 0.0
        %1078 = vmatpush1.msra.mxu0 0.0
        %1079 = vmatprep.subr.mxu0 0.0
        %1080 = vmatpush1.msra.mxu0 0.0
        %1081 = vmatprep.subr.mxu0 0.0
        %1082 = vmatpush1.msra.mxu0 0.0
        %1083 = vmatprep.subr.mxu0 0.0
        %1084 = vmatpush1.msra.mxu0 0.0
        %1085 = vmatprep.subr.mxu0 0.0
        %1086 = vmatpush1.msra.mxu0 0.0
        %1087 = vmatprep.subr.mxu0 0.0
        %1088 = vmatpush1.msra.mxu0 0.0
        %1089 = vmatprep.subr.mxu0 0.0
        %1090 = vmatpush1.msra.mxu0 0.0
        %1091 = vmatprep.mubr.f32.mxu0 0.0
        %1092 = vmatmul.mubr.f32.gmra.mrb[0].mxu0 %v749
        %v1093 = vpop.f32.mrb[0].mxu0
        %v1094 = vadd.f32 %v730, %v1093
        %v1095 = vpop.f32.mrb[0].mxu0
        %v1096 = vadd.f32 %v730, %v1095
        %1097 = vmatprep.mubr.f32.mxu0 0.0
        %1098 = vmatmul.mubr.f32.gmra.mrb[0].mxu0 %v752
        %v1099 = vpop.f32.mrb[0].mxu0
        %v1100 = vadd.f32 %v735, %v1099
        %v1101 = vpop.f32.mrb[0].mxu0
        %v1102 = vadd.f32 %v735, %v1101
        %1103 = vmatprep.mubr.f32.mxu0 0.0
        %1104 = vmatmul.mubr.f32.gmra.mrb[0].mxu0 %v755
        %v1105 = vpop.f32.mrb[0].mxu0
        %v1106 = vadd.f32 %v740, %v1105
        %v1107 = vpop.f32.mrb[0].mxu0
        %v1108 = vadd.f32 %v740, %v1107
        %1109 = vmatprep.mubr.f32.mxu0 0.0
        %1110 = vmatmul.mubr.f32.gmra.mrb[0].mxu0 %v758
        %v1111 = vpop.f32.mrb[0].mxu0
        %v1112 = vadd.f32 %v745, %v1111
        %v1113 = vpop.f32.mrb[0].mxu0
        %v1114 = vadd.f32 %v745, %v1113
        %1115 = vdwg.mxu0
        %v1116 = vtanh.pop %v827
        %v1117 = vtanh.pop %v829
        %v1118 = vtanh.pop %v916
        %v1119 = vtanh.pop %v918
        %v1120 = vtanh.pop %v1005
        %v1121 = vtanh.pop %v1007
        %v1122 = vtanh.pop %v1094
        %v1123 = vtanh.pop %v1096
        %v1124 = vtanh.pop %v833
        %v1125 = vtanh.pop %v835
        %v1126 = vtanh.pop %v922
        %v1127 = vtanh.pop %v924
        %v1128 = vtanh.pop %v1011
        %v1129 = vtanh.pop %v1013
        %v1130 = vtanh.pop %v1100
        %v1131 = vtanh.pop %v1102
        %v1132 = vtanh.pop %v839
        %v1133 = vtanh.pop %v841
        %v1134 = vtanh.pop %v928
        %v1135 = vtanh.pop %v930
        %v1136 = vtanh.pop %v1017
        %v1137 = vtanh.pop %v1019
        %v1138 = vtanh.pop %v1106
        %v1139 = vtanh.pop %v1108
        %v1140 = vtanh.pop %v845
        %v1141 = vtanh.pop %v847
        %v1142 = vtanh.pop %v934
        %v1143 = vtanh.pop %v936
        %v1144 = vtanh.pop %v1023
        %v1145 = vtanh.pop %v1025
        %v1146 = vtanh.pop %v1112
        %v1147 = vtanh.pop %v1114
        %1149 = vset.pattern.permute.xlu0 0
        %1150 = vperm.xlu0 %1149, %v236
        %v1151 = vpop.permute.xlu0 %1150
        %1154 = vset.pattern.permute.xlu0 0
        %1155 = vperm.xlu0 %1154, %v237
        %v1156 = vpop.permute.xlu0 %1155
        %1159 = vset.pattern.permute.xlu0 0
        %1160 = vperm.xlu0 %1159, %v238
        %v1161 = vpop.permute.xlu0 %1160
        %1164 = vset.pattern.permute.xlu0 0
        %1165 = vperm.xlu0 %1164, %v239
        %v1166 = vpop.permute.xlu0 %1165
        %v1169 = vsel %vm747, %v245, 0
        %v1172 = vsel %vm747, %v246, 0
        %v1175 = vsel %vm747, %v247, 0
        %v1178 = vsel %vm747, %v248, 0
        %1180 = vmatprep.subr.mxu0 %v1117
        %1181 = vmatpush1.msra.mxu0 %v1116
        %1182 = vmatprep.subr.mxu0 %v1125
        %1183 = vmatpush1.msra.mxu0 %v1124
        %1184 = vmatprep.subr.mxu0 %v1133
        %1185 = vmatpush1.msra.mxu0 %v1132
        %1186 = vmatprep.subr.mxu0 %v1141
        %1187 = vmatpush1.msra.mxu0 %v1140
        %1188 = vmatprep.subr.mxu0 0.0
        %1189 = vmatpush1.msra.mxu0 0.0
        %1190 = vmatprep.subr.mxu0 0.0
        %1191 = vmatpush1.msra.mxu0 0.0
        %1192 = vmatprep.subr.mxu0 0.0
        %1193 = vmatpush1.msra.mxu0 0.0
        %1194 = vmatprep.subr.mxu0 0.0
        %1195 = vmatpush1.msra.mxu0 0.0
        %1196 = vmatprep.subr.mxu0 0.0
        %1197 = vmatpush1.msra.mxu0 0.0
        %1198 = vmatprep.subr.mxu0 0.0
        %1199 = vmatpush1.msra.mxu0 0.0
        %1200 = vmatprep.subr.mxu0 0.0
        %1201 = vmatpush1.msra.mxu0 0.0
        %1202 = vmatprep.subr.mxu0 0.0
        %1203 = vmatpush1.msra.mxu0 0.0
        %1204 = vmatprep.subr.mxu0 0.0
        %1205 = vmatpush1.msra.mxu0 0.0
        %1206 = vmatprep.subr.mxu0 0.0
        %1207 = vmatpush1.msra.mxu0 0.0
        %1208 = vmatprep.subr.mxu0 0.0
        %1209 = vmatpush1.msra.mxu0 0.0
        %1210 = vmatprep.subr.mxu0 0.0
        %1211 = vmatpush1.msra.mxu0 0.0
        %1212 = vmatprep.subr.mxu0 0.0
        %1213 = vmatpush1.msra.mxu0 0.0
        %1214 = vmatprep.subr.mxu0 0.0
        %1215 = vmatpush1.msra.mxu0 0.0
        %1216 = vmatprep.subr.mxu0 0.0
        %1217 = vmatpush1.msra.mxu0 0.0
        %1218 = vmatprep.subr.mxu0 0.0
        %1219 = vmatpush1.msra.mxu0 0.0
        %1220 = vmatprep.subr.mxu0 0.0
        %1221 = vmatpush1.msra.mxu0 0.0
        %1222 = vmatprep.subr.mxu0 0.0
        %1223 = vmatpush1.msra.mxu0 0.0
        %1224 = vmatprep.subr.mxu0 0.0
        %1225 = vmatpush1.msra.mxu0 0.0
        %1226 = vmatprep.subr.mxu0 0.0
        %1227 = vmatpush1.msra.mxu0 0.0
        %1228 = vmatprep.subr.mxu0 0.0
        %1229 = vmatpush1.msra.mxu0 0.0
        %1230 = vmatprep.subr.mxu0 0.0
        %1231 = vmatpush1.msra.mxu0 0.0
        %1232 = vmatprep.subr.mxu0 0.0
        %1233 = vmatpush1.msra.mxu0 0.0
        %1234 = vmatprep.subr.mxu0 0.0
        %1235 = vmatpush1.msra.mxu0 0.0
        %1236 = vmatprep.subr.mxu0 0.0
        %1237 = vmatpush1.msra.mxu0 0.0
        %1238 = vmatprep.subr.mxu0 0.0
        %1239 = vmatpush1.msra.mxu0 0.0
        %1240 = vmatprep.subr.mxu0 0.0
        %1241 = vmatpush1.msra.mxu0 0.0
        %1242 = vmatprep.subr.mxu0 0.0
        %1243 = vmatpush1.msra.mxu0 0.0
        %1244 = vmatprep.mubr.f32.mxu0 0.0
        %1245 = vmatmul.mubr.f32.gmra.mrb[0].mxu0 %v1169
        %v1246 = vpop.f32.mrb[0].mxu0
        %v1247 = vadd.f32 %v1151, %v1246
        %v1248 = vpop.f32.mrb[0].mxu0
        %v1249 = vadd.f32 %v1151, %v1248
        %1250 = vmatprep.mubr.f32.mxu0 0.0
        %1251 = vmatmul.mubr.f32.gmra.mrb[0].mxu0 %v1172
        %v1252 = vpop.f32.mrb[0].mxu0
        %v1253 = vadd.f32 %v1156, %v1252
        %v1254 = vpop.f32.mrb[0].mxu0
        %v1255 = vadd.f32 %v1156, %v1254
        %1256 = vmatprep.mubr.f32.mxu0 0.0
        %1257 = vmatmul.mubr.f32.gmra.mrb[0].mxu0 %v1175
        %v1258 = vpop.f32.mrb[0].mxu0
        %v1259 = vadd.f32 %v1161, %v1258
        %v1260 = vpop.f32.mrb[0].mxu0
        %v1261 = vadd.f32 %v1161, %v1260
        %1262 = vmatprep.mubr.f32.mxu0 0.0
        %1263 = vmatmul.mubr.f32.gmra.mrb[0].mxu0 %v1178
        %v1264 = vpop.f32.mrb[0].mxu0
        %v1265 = vadd.f32 %v1166, %v1264
        %v1266 = vpop.f32.mrb[0].mxu0
        %v1267 = vadd.f32 %v1166, %v1266
        %1268 = vdwg.mxu0
        %1269 = vmatprep.subr.mxu0 %v1119
        %1270 = vmatpush1.msra.mxu0 %v1118
        %1271 = vmatprep.subr.mxu0 %v1127
        %1272 = vmatpush1.msra.mxu0 %v1126
        %1273 = vmatprep.subr.mxu0 %v1135
        %1274 = vmatpush1.msra.mxu0 %v1134
        %1275 = vmatprep.subr.mxu0 %v1143
        %1276 = vmatpush1.msra.mxu0 %v1142
        %1277 = vmatprep.subr.mxu0 0.0
        %1278 = vmatpush1.msra.mxu0 0.0
        %1279 = vmatprep.subr.mxu0 0.0
        %1280 = vmatpush1.msra.mxu0 0.0
        %1281 = vmatprep.subr.mxu0 0.0
        %1282 = vmatpush1.msra.mxu0 0.0
        %1283 = vmatprep.subr.mxu0 0.0
        %1284 = vmatpush1.msra.mxu0 0.0
        %1285 = vmatprep.subr.mxu0 0.0
        %1286 = vmatpush1.msra.mxu0 0.0
        %1287 = vmatprep.subr.mxu0 0.0
        %1288 = vmatpush1.msra.mxu0 0.0
        %1289 = vmatprep.subr.mxu0 0.0
        %1290 = vmatpush1.msra.mxu0 0.0
        %1291 = vmatprep.subr.mxu0 0.0
        %1292 = vmatpush1.msra.mxu0 0.0
        %1293 = vmatprep.subr.mxu0 0.0
        %1294 = vmatpush1.msra.mxu0 0.0
        %1295 = vmatprep.subr.mxu0 0.0
        %1296 = vmatpush1.msra.mxu0 0.0
        %1297 = vmatprep.subr.mxu0 0.0
        %1298 = vmatpush1.msra.mxu0 0.0
        %1299 = vmatprep.subr.mxu0 0.0
        %1300 = vmatpush1.msra.mxu0 0.0
        %1301 = vmatprep.subr.mxu0 0.0
        %1302 = vmatpush1.msra.mxu0 0.0
        %1303 = vmatprep.subr.mxu0 0.0
        %1304 = vmatpush1.msra.mxu0 0.0
        %1305 = vmatprep.subr.mxu0 0.0
        %1306 = vmatpush1.msra.mxu0 0.0
        %1307 = vmatprep.subr.mxu0 0.0
        %1308 = vmatpush1.msra.mxu0 0.0
        %1309 = vmatprep.subr.mxu0 0.0
        %1310 = vmatpush1.msra.mxu0 0.0
        %1311 = vmatprep.subr.mxu0 0.0
        %1312 = vmatpush1.msra.mxu0 0.0
        %1313 = vmatprep.subr.mxu0 0.0
        %1314 = vmatpush1.msra.mxu0 0.0
        %1315 = vmatprep.subr.mxu0 0.0
        %1316 = vmatpush1.msra.mxu0 0.0
        %1317 = vmatprep.subr.mxu0 0.0
        %1318 = vmatpush1.msra.mxu0 0.0
        %1319 = vmatprep.subr.mxu0 0.0
        %1320 = vmatpush1.msra.mxu0 0.0
        %1321 = vmatprep.subr.mxu0 0.0
        %1322 = vmatpush1.msra.mxu0 0.0
        %1323 = vmatprep.subr.mxu0 0.0
        %1324 = vmatpush1.msra.mxu0 0.0
        %1325 = vmatprep.subr.mxu0 0.0
        %1326 = vmatpush1.msra.mxu0 0.0
        %1327 = vmatprep.subr.mxu0 0.0
        %1328 = vmatpush1.msra.mxu0 0.0
        %1329 = vmatprep.subr.mxu0 0.0
        %1330 = vmatpush1.msra.mxu0 0.0
        %1331 = vmatprep.subr.mxu0 0.0
        %1332 = vmatpush1.msra.mxu0 0.0
        %1333 = vmatprep.mubr.f32.mxu0 0.0
        %1334 = vmatmul.mubr.f32.gmra.mrb[0].mxu0 %v1169
        %v1335 = vpop.f32.mrb[0].mxu0
        %v1336 = vadd.f32 %v1151, %v1335
        %v1337 = vpop.f32.mrb[0].mxu0
        %v1338 = vadd.f32 %v1151, %v1337
        %1339 = vmatprep.mubr.f32.mxu0 0.0
        %1340 = vmatmul.mubr.f32.gmra.mrb[0].mxu0 %v1172
        %v1341 = vpop.f32.mrb[0].mxu0
        %v1342 = vadd.f32 %v1156, %v1341
        %v1343 = vpop.f32.mrb[0].mxu0
        %v1344 = vadd.f32 %v1156, %v1343
        %1345 = vmatprep.mubr.f32.mxu0 0.0
        %1346 = vmatmul.mubr.f32.gmra.mrb[0].mxu0 %v1175
        %v1347 = vpop.f32.mrb[0].mxu0
        %v1348 = vadd.f32 %v1161, %v1347
        %v1349 = vpop.f32.mrb[0].mxu0
        %v1350 = vadd.f32 %v1161, %v1349
        %1351 = vmatprep.mubr.f32.mxu0 0.0
        %1352 = vmatmul.mubr.f32.gmra.mrb[0].mxu0 %v1178
        %v1353 = vpop.f32.mrb[0].mxu0
        %v1354 = vadd.f32 %v1166, %v1353
        %v1355 = vpop.f32.mrb[0].mxu0
        %v1356 = vadd.f32 %v1166, %v1355
        %1357 = vdwg.mxu0
        %1358 = vmatprep.subr.mxu0 %v1121
        %1359 = vmatpush1.msra.mxu0 %v1120
        %1360 = vmatprep.subr.mxu0 %v1129
        %1361 = vmatpush1.msra.mxu0 %v1128
        %1362 = vmatprep.subr.mxu0 %v1137
        %1363 = vmatpush1.msra.mxu0 %v1136
        %1364 = vmatprep.subr.mxu0 %v1145
        %1365 = vmatpush1.msra.mxu0 %v1144
        %1366 = vmatprep.subr.mxu0 0.0
        %1367 = vmatpush1.msra.mxu0 0.0
        %1368 = vmatprep.subr.mxu0 0.0
        %1369 = vmatpush1.msra.mxu0 0.0
        %1370 = vmatprep.subr.mxu0 0.0
        %1371 = vmatpush1.msra.mxu0 0.0
        %1372 = vmatprep.subr.mxu0 0.0
        %1373 = vmatpush1.msra.mxu0 0.0
        %1374 = vmatprep.subr.mxu0 0.0
        %1375 = vmatpush1.msra.mxu0 0.0
        %1376 = vmatprep.subr.mxu0 0.0
        %1377 = vmatpush1.msra.mxu0 0.0
        %1378 = vmatprep.subr.mxu0 0.0
        %1379 = vmatpush1.msra.mxu0 0.0
        %1380 = vmatprep.subr.mxu0 0.0
        %1381 = vmatpush1.msra.mxu0 0.0
        %1382 = vmatprep.subr.mxu0 0.0
        %1383 = vmatpush1.msra.mxu0 0.0
        %1384 = vmatprep.subr.mxu0 0.0
        %1385 = vmatpush1.msra.mxu0 0.0
        %1386 = vmatprep.subr.mxu0 0.0
        %1387 = vmatpush1.msra.mxu0 0.0
        %1388 = vmatprep.subr.mxu0 0.0
        %1389 = vmatpush1.msra.mxu0 0.0
        %1390 = vmatprep.subr.mxu0 0.0
        %1391 = vmatpush1.msra.mxu0 0.0
        %1392 = vmatprep.subr.mxu0 0.0
        %1393 = vmatpush1.msra.mxu0 0.0
        %1394 = vmatprep.subr.mxu0 0.0
        %1395 = vmatpush1.msra.mxu0 0.0
        %1396 = vmatprep.subr.mxu0 0.0
        %1397 = vmatpush1.msra.mxu0 0.0
        %1398 = vmatprep.subr.mxu0 0.0
        %1399 = vmatpush1.msra.mxu0 0.0
        %1400 = vmatprep.subr.mxu0 0.0
        %1401 = vmatpush1.msra.mxu0 0.0
        %1402 = vmatprep.subr.mxu0 0.0
        %1403 = vmatpush1.msra.mxu0 0.0
        %1404 = vmatprep.subr.mxu0 0.0
        %1405 = vmatpush1.msra.mxu0 0.0
        %1406 = vmatprep.subr.mxu0 0.0
        %1407 = vmatpush1.msra.mxu0 0.0
        %1408 = vmatprep.subr.mxu0 0.0
        %1409 = vmatpush1.msra.mxu0 0.0
        %1410 = vmatprep.subr.mxu0 0.0
        %1411 = vmatpush1.msra.mxu0 0.0
        %1412 = vmatprep.subr.mxu0 0.0
        %1413 = vmatpush1.msra.mxu0 0.0
        %1414 = vmatprep.subr.mxu0 0.0
        %1415 = vmatpush1.msra.mxu0 0.0
        %1416 = vmatprep.subr.mxu0 0.0
        %1417 = vmatpush1.msra.mxu0 0.0
        %1418 = vmatprep.subr.mxu0 0.0
        %1419 = vmatpush1.msra.mxu0 0.0
        %1420 = vmatprep.subr.mxu0 0.0
        %1421 = vmatpush1.msra.mxu0 0.0
        %1422 = vmatprep.mubr.f32.mxu0 0.0
        %1423 = vmatmul.mubr.f32.gmra.mrb[0].mxu0 %v1169
        %v1424 = vpop.f32.mrb[0].mxu0
        %v1425 = vadd.f32 %v1151, %v1424
        %v1426 = vpop.f32.mrb[0].mxu0
        %v1427 = vadd.f32 %v1151, %v1426
        %1428 = vmatprep.mubr.f32.mxu0 0.0
        %1429 = vmatmul.mubr.f32.gmra.mrb[0].mxu0 %v1172
        %v1430 = vpop.f32.mrb[0].mxu0
        %v1431 = vadd.f32 %v1156, %v1430
        %v1432 = vpop.f32.mrb[0].mxu0
        %v1433 = vadd.f32 %v1156, %v1432
        %1434 = vmatprep.mubr.f32.mxu0 0.0
        %1435 = vmatmul.mubr.f32.gmra.mrb[0].mxu0 %v1175
        %v1436 = vpop.f32.mrb[0].mxu0
        %v1437 = vadd.f32 %v1161, %v1436
        %v1438 = vpop.f32.mrb[0].mxu0
        %v1439 = vadd.f32 %v1161, %v1438
        %1440 = vmatprep.mubr.f32.mxu0 0.0
        %1441 = vmatmul.mubr.f32.gmra.mrb[0].mxu0 %v1178
        %v1442 = vpop.f32.mrb[0].mxu0
        %v1443 = vadd.f32 %v1166, %v1442
        %v1444 = vpop.f32.mrb[0].mxu0
        %v1445 = vadd.f32 %v1166, %v1444
        %1446 = vdwg.mxu0
        %1447 = vmatprep.subr.mxu0 %v1123
        %1448 = vmatpush1.msra.mxu0 %v1122
        %1449 = vmatprep.subr.mxu0 %v1131
        %1450 = vmatpush1.msra.mxu0 %v1130
        %1451 = vmatprep.subr.mxu0 %v1139
        %1452 = vmatpush1.msra.mxu0 %v1138
        %1453 = vmatprep.subr.mxu0 %v1147
        %1454 = vmatpush1.msra.mxu0 %v1146
        %1455 = vmatprep.subr.mxu0 0.0
        %1456 = vmatpush1.msra.mxu0 0.0
        %1457 = vmatprep.subr.mxu0 0.0
        %1458 = vmatpush1.msra.mxu0 0.0
        %1459 = vmatprep.subr.mxu0 0.0
        %1460 = vmatpush1.msra.mxu0 0.0
        %1461 = vmatprep.subr.mxu0 0.0
        %1462 = vmatpush1.msra.mxu0 0.0
        %1463 = vmatprep.subr.mxu0 0.0
        %1464 = vmatpush1.msra.mxu0 0.0
        %1465 = vmatprep.subr.mxu0 0.0
        %1466 = vmatpush1.msra.mxu0 0.0
        %1467 = vmatprep.subr.mxu0 0.0
        %1468 = vmatpush1.msra.mxu0 0.0
        %1469 = vmatprep.subr.mxu0 0.0
        %1470 = vmatpush1.msra.mxu0 0.0
        %1471 = vmatprep.subr.mxu0 0.0
        %1472 = vmatpush1.msra.mxu0 0.0
        %1473 = vmatprep.subr.mxu0 0.0
        %1474 = vmatpush1.msra.mxu0 0.0
        %1475 = vmatprep.subr.mxu0 0.0
        %1476 = vmatpush1.msra.mxu0 0.0
        %1477 = vmatprep.subr.mxu0 0.0
        %1478 = vmatpush1.msra.mxu0 0.0
        %1479 = vmatprep.subr.mxu0 0.0
        %1480 = vmatpush1.msra.mxu0 0.0
        %1481 = vmatprep.subr.mxu0 0.0
        %1482 = vmatpush1.msra.mxu0 0.0
        %1483 = vmatprep.subr.mxu0 0.0
        %1484 = vmatpush1.msra.mxu0 0.0
        %1485 = vmatprep.subr.mxu0 0.0
        %1486 = vmatpush1.msra.mxu0 0.0
        %1487 = vmatprep.subr.mxu0 0.0
        %1488 = vmatpush1.msra.mxu0 0.0
        %1489 = vmatprep.subr.mxu0 0.0
        %1490 = vmatpush1.msra.mxu0 0.0
        %1491 = vmatprep.subr.mxu0 0.0
        %1492 = vmatpush1.msra.mxu0 0.0
        %1493 = vmatprep.subr.mxu0 0.0
        %1494 = vmatpush1.msra.mxu0 0.0
        %1495 = vmatprep.subr.mxu0 0.0
        %1496 = vmatpush1.msra.mxu0 0.0
        %1497 = vmatprep.subr.mxu0 0.0
        %1498 = vmatpush1.msra.mxu0 0.0
        %1499 = vmatprep.subr.mxu0 0.0
        %1500 = vmatpush1.msra.mxu0 0.0
        %1501 = vmatprep.subr.mxu0 0.0
        %1502 = vmatpush1.msra.mxu0 0.0
        %1503 = vmatprep.subr.mxu0 0.0
        %1504 = vmatpush1.msra.mxu0 0.0
        %1505 = vmatprep.subr.mxu0 0.0
        %1506 = vmatpush1.msra.mxu0 0.0
        %1507 = vmatprep.subr.mxu0 0.0
        %1508 = vmatpush1.msra.mxu0 0.0
        %1509 = vmatprep.subr.mxu0 0.0
        %1510 = vmatpush1.msra.mxu0 0.0
        %1511 = vmatprep.mubr.f32.mxu0 0.0
        %1512 = vmatmul.mubr.f32.gmra.mrb[0].mxu0 %v1169
        %v1513 = vpop.f32.mrb[0].mxu0
        %v1514 = vadd.f32 %v1151, %v1513
        %v1515 = vpop.f32.mrb[0].mxu0
        %v1516 = vadd.f32 %v1151, %v1515
        %1517 = vmatprep.mubr.f32.mxu0 0.0
        %1518 = vmatmul.mubr.f32.gmra.mrb[0].mxu0 %v1172
        %v1519 = vpop.f32.mrb[0].mxu0
        %v1520 = vadd.f32 %v1156, %v1519
        %v1521 = vpop.f32.mrb[0].mxu0
        %v1522 = vadd.f32 %v1156, %v1521
        %1523 = vmatprep.mubr.f32.mxu0 0.0
        %1524 = vmatmul.mubr.f32.gmra.mrb[0].mxu0 %v1175
        %v1525 = vpop.f32.mrb[0].mxu0
        %v1526 = vadd.f32 %v1161, %v1525
        %v1527 = vpop.f32.mrb[0].mxu0
        %v1528 = vadd.f32 %v1161, %v1527
        %1529 = vmatprep.mubr.f32.mxu0 0.0
        %1530 = vmatmul.mubr.f32.gmra.mrb[0].mxu0 %v1178
        %v1531 = vpop.f32.mrb[0].mxu0
        %v1532 = vadd.f32 %v1166, %v1531
        %v1533 = vpop.f32.mrb[0].mxu0
        %v1534 = vadd.f32 %v1166, %v1533
        %1535 = vdwg.mxu0
        %v1536 = vtanh.pop %v1247
        %v1537 = vtanh.pop %v1249
        %v1538 = vtanh.pop %v1336
        %v1539 = vtanh.pop %v1338
        %v1540 = vtanh.pop %v1425
        %v1541 = vtanh.pop %v1427
        %v1542 = vtanh.pop %v1514
        %v1543 = vtanh.pop %v1516
        %v1544 = vtanh.pop %v1253
        %v1545 = vtanh.pop %v1255
        %v1546 = vtanh.pop %v1342
        %v1547 = vtanh.pop %v1344
        %v1548 = vtanh.pop %v1431
        %v1549 = vtanh.pop %v1433
        %v1550 = vtanh.pop %v1520
        %v1551 = vtanh.pop %v1522
        %v1552 = vtanh.pop %v1259
        %v1553 = vtanh.pop %v1261
        %v1554 = vtanh.pop %v1348
        %v1555 = vtanh.pop %v1350
        %v1556 = vtanh.pop %v1437
        %v1557 = vtanh.pop %v1439
        %v1558 = vtanh.pop %v1526
        %v1559 = vtanh.pop %v1528
        %v1560 = vtanh.pop %v1265
        %v1561 = vtanh.pop %v1267
        %v1562 = vtanh.pop %v1354
        %v1563 = vtanh.pop %v1356
        %v1564 = vtanh.pop %v1443
        %v1565 = vtanh.pop %v1445
        %v1566 = vtanh.pop %v1532
        %v1567 = vtanh.pop %v1534
        %v1568 = vld [vmem:[%s3] sm:$0x1]
        %1570 = vset.pattern.permute.xlu0 0
        %1571 = vperm.xlu0 %1570, %v240
        %v1572 = vpop.permute.xlu0 %1571
        %v1575 = vsel %vm747, %v1568, 0
        %1577 = vmatprep.subr.mxu0 %v1537
        %1578 = vmatpush1.msra.mxu0 %v1536
        %1579 = vmatprep.subr.mxu0 %v1545
        %1580 = vmatpush1.msra.mxu0 %v1544
        %1581 = vmatprep.subr.mxu0 %v1553
        %1582 = vmatpush1.msra.mxu0 %v1552
        %1583 = vmatprep.subr.mxu0 %v1561
        %1584 = vmatpush1.msra.mxu0 %v1560
        %1585 = vmatprep.subr.mxu0 0.0
        %1586 = vmatpush1.msra.mxu0 0.0
        %1587 = vmatprep.subr.mxu0 0.0
        %1588 = vmatpush1.msra.mxu0 0.0
        %1589 = vmatprep.subr.mxu0 0.0
        %1590 = vmatpush1.msra.mxu0 0.0
        %1591 = vmatprep.subr.mxu0 0.0
        %1592 = vmatpush1.msra.mxu0 0.0
        %1593 = vmatprep.subr.mxu0 0.0
        %1594 = vmatpush1.msra.mxu0 0.0
        %1595 = vmatprep.subr.mxu0 0.0
        %1596 = vmatpush1.msra.mxu0 0.0
        %1597 = vmatprep.subr.mxu0 0.0
        %1598 = vmatpush1.msra.mxu0 0.0
        %1599 = vmatprep.subr.mxu0 0.0
        %1600 = vmatpush1.msra.mxu0 0.0
        %1601 = vmatprep.subr.mxu0 0.0
        %1602 = vmatpush1.msra.mxu0 0.0
        %1603 = vmatprep.subr.mxu0 0.0
        %1604 = vmatpush1.msra.mxu0 0.0
        %1605 = vmatprep.subr.mxu0 0.0
        %1606 = vmatpush1.msra.mxu0 0.0
        %1607 = vmatprep.subr.mxu0 0.0
        %1608 = vmatpush1.msra.mxu0 0.0
        %1609 = vmatprep.subr.mxu0 0.0
        %1610 = vmatpush1.msra.mxu0 0.0
        %1611 = vmatprep.subr.mxu0 0.0
        %1612 = vmatpush1.msra.mxu0 0.0
        %1613 = vmatprep.subr.mxu0 0.0
        %1614 = vmatpush1.msra.mxu0 0.0
        %1615 = vmatprep.subr.mxu0 0.0
        %1616 = vmatpush1.msra.mxu0 0.0
        %1617 = vmatprep.subr.mxu0 0.0
        %1618 = vmatpush1.msra.mxu0 0.0
        %1619 = vmatprep.subr.mxu0 0.0
        %1620 = vmatpush1.msra.mxu0 0.0
        %1621 = vmatprep.subr.mxu0 0.0
        %1622 = vmatpush1.msra.mxu0 0.0
        %1623 = vmatprep.subr.mxu0 0.0
        %1624 = vmatpush1.msra.mxu0 0.0
        %1625 = vmatprep.subr.mxu0 0.0
        %1626 = vmatpush1.msra.mxu0 0.0
        %1627 = vmatprep.subr.mxu0 0.0
        %1628 = vmatpush1.msra.mxu0 0.0
        %1629 = vmatprep.subr.mxu0 0.0
        %1630 = vmatpush1.msra.mxu0 0.0
        %1631 = vmatprep.subr.mxu0 0.0
        %1632 = vmatpush1.msra.mxu0 0.0
        %1633 = vmatprep.subr.mxu0 0.0
        %1634 = vmatpush1.msra.mxu0 0.0
        %1635 = vmatprep.subr.mxu0 0.0
        %1636 = vmatpush1.msra.mxu0 0.0
        %1637 = vmatprep.subr.mxu0 0.0
        %1638 = vmatpush1.msra.mxu0 0.0
        %1639 = vmatprep.subr.mxu0 0.0
        %1640 = vmatpush1.msra.mxu0 0.0
        %1641 = vmatprep.mubr.f32.mxu0 0.0
        %1642 = vmatmul.mubr.f32.gmra.mrb[0].mxu0 %v1575
        %v1643 = vpop.f32.mrb[0].mxu0
        %v1644 = vadd.f32 %v1572, %v1643
        %v1645 = vpop.f32.mrb[0].mxu0
        %v1646 = vadd.f32 %v1572, %v1645
        %1647 = vdwg.mxu0
        %1648 = vmatprep.subr.mxu0 %v1539
        %1649 = vmatpush1.msra.mxu0 %v1538
        %1650 = vmatprep.subr.mxu0 %v1547
        %1651 = vmatpush1.msra.mxu0 %v1546
        %1652 = vmatprep.subr.mxu0 %v1555
        %1653 = vmatpush1.msra.mxu0 %v1554
        %1654 = vmatprep.subr.mxu0 %v1563
        %1655 = vmatpush1.msra.mxu0 %v1562
        %1656 = vmatprep.subr.mxu0 0.0
        %1657 = vmatpush1.msra.mxu0 0.0
        %1658 = vmatprep.subr.mxu0 0.0
        %1659 = vmatpush1.msra.mxu0 0.0
        %1660 = vmatprep.subr.mxu0 0.0
        %1661 = vmatpush1.msra.mxu0 0.0
        %1662 = vmatprep.subr.mxu0 0.0
        %1663 = vmatpush1.msra.mxu0 0.0
        %1664 = vmatprep.subr.mxu0 0.0
        %1665 = vmatpush1.msra.mxu0 0.0
        %1666 = vmatprep.subr.mxu0 0.0
        %1667 = vmatpush1.msra.mxu0 0.0
        %1668 = vmatprep.subr.mxu0 0.0
        %1669 = vmatpush1.msra.mxu0 0.0
        %1670 = vmatprep.subr.mxu0 0.0
        %1671 = vmatpush1.msra.mxu0 0.0
        %1672 = vmatprep.subr.mxu0 0.0
        %1673 = vmatpush1.msra.mxu0 0.0
        %1674 = vmatprep.subr.mxu0 0.0
        %1675 = vmatpush1.msra.mxu0 0.0
        %1676 = vmatprep.subr.mxu0 0.0
        %1677 = vmatpush1.msra.mxu0 0.0
        %1678 = vmatprep.subr.mxu0 0.0
        %1679 = vmatpush1.msra.mxu0 0.0
        %1680 = vmatprep.subr.mxu0 0.0
        %1681 = vmatpush1.msra.mxu0 0.0
        %1682 = vmatprep.subr.mxu0 0.0
        %1683 = vmatpush1.msra.mxu0 0.0
        %1684 = vmatprep.subr.mxu0 0.0
        %1685 = vmatpush1.msra.mxu0 0.0
        %1686 = vmatprep.subr.mxu0 0.0
        %1687 = vmatpush1.msra.mxu0 0.0
        %1688 = vmatprep.subr.mxu0 0.0
        %1689 = vmatpush1.msra.mxu0 0.0
        %1690 = vmatprep.subr.mxu0 0.0
        %1691 = vmatpush1.msra.mxu0 0.0
        %1692 = vmatprep.subr.mxu0 0.0
        %1693 = vmatpush1.msra.mxu0 0.0
        %1694 = vmatprep.subr.mxu0 0.0
        %1695 = vmatpush1.msra.mxu0 0.0
        %1696 = vmatprep.subr.mxu0 0.0
        %1697 = vmatpush1.msra.mxu0 0.0
        %1698 = vmatprep.subr.mxu0 0.0
        %1699 = vmatpush1.msra.mxu0 0.0
        %1700 = vmatprep.subr.mxu0 0.0
        %1701 = vmatpush1.msra.mxu0 0.0
        %1702 = vmatprep.subr.mxu0 0.0
        %1703 = vmatpush1.msra.mxu0 0.0
        %1704 = vmatprep.subr.mxu0 0.0
        %1705 = vmatpush1.msra.mxu0 0.0
        %1706 = vmatprep.subr.mxu0 0.0
        %1707 = vmatpush1.msra.mxu0 0.0
        %1708 = vmatprep.subr.mxu0 0.0
        %1709 = vmatpush1.msra.mxu0 0.0
        %1710 = vmatprep.subr.mxu0 0.0
        %1711 = vmatpush1.msra.mxu0 0.0
        %1712 = vmatprep.mubr.f32.mxu0 0.0
        %1713 = vmatmul.mubr.f32.gmra.mrb[0].mxu0 %v1575
        %v1714 = vpop.f32.mrb[0].mxu0
        %v1715 = vadd.f32 %v1572, %v1714
        %v1716 = vpop.f32.mrb[0].mxu0
        %v1717 = vadd.f32 %v1572, %v1716
        %1718 = vdwg.mxu0
        %1719 = vmatprep.subr.mxu0 %v1541
        %1720 = vmatpush1.msra.mxu0 %v1540
        %1721 = vmatprep.subr.mxu0 %v1549
        %1722 = vmatpush1.msra.mxu0 %v1548
        %1723 = vmatprep.subr.mxu0 %v1557
        %1724 = vmatpush1.msra.mxu0 %v1556
        %1725 = vmatprep.subr.mxu0 %v1565
        %1726 = vmatpush1.msra.mxu0 %v1564
        %1727 = vmatprep.subr.mxu0 0.0
        %1728 = vmatpush1.msra.mxu0 0.0
        %1729 = vmatprep.subr.mxu0 0.0
        %1730 = vmatpush1.msra.mxu0 0.0
        %1731 = vmatprep.subr.mxu0 0.0
        %1732 = vmatpush1.msra.mxu0 0.0
        %1733 = vmatprep.subr.mxu0 0.0
        %1734 = vmatpush1.msra.mxu0 0.0
        %1735 = vmatprep.subr.mxu0 0.0
        %1736 = vmatpush1.msra.mxu0 0.0
        %1737 = vmatprep.subr.mxu0 0.0
        %1738 = vmatpush1.msra.mxu0 0.0
        %1739 = vmatprep.subr.mxu0 0.0
        %1740 = vmatpush1.msra.mxu0 0.0
        %1741 = vmatprep.subr.mxu0 0.0
        %1742 = vmatpush1.msra.mxu0 0.0
        %1743 = vmatprep.subr.mxu0 0.0
        %1744 = vmatpush1.msra.mxu0 0.0
        %1745 = vmatprep.subr.mxu0 0.0
        %1746 = vmatpush1.msra.mxu0 0.0
        %1747 = vmatprep.subr.mxu0 0.0
        %1748 = vmatpush1.msra.mxu0 0.0
        %1749 = vmatprep.subr.mxu0 0.0
        %1750 = vmatpush1.msra.mxu0 0.0
        %1751 = vmatprep.subr.mxu0 0.0
        %1752 = vmatpush1.msra.mxu0 0.0
        %1753 = vmatprep.subr.mxu0 0.0
        %1754 = vmatpush1.msra.mxu0 0.0
        %1755 = vmatprep.subr.mxu0 0.0
        %1756 = vmatpush1.msra.mxu0 0.0
        %1757 = vmatprep.subr.mxu0 0.0
        %1758 = vmatpush1.msra.mxu0 0.0
        %1759 = vmatprep.subr.mxu0 0.0
        %1760 = vmatpush1.msra.mxu0 0.0
        %1761 = vmatprep.subr.mxu0 0.0
        %1762 = vmatpush1.msra.mxu0 0.0
        %1763 = vmatprep.subr.mxu0 0.0
        %1764 = vmatpush1.msra.mxu0 0.0
        %1765 = vmatprep.subr.mxu0 0.0
        %1766 = vmatpush1.msra.mxu0 0.0
        %1767 = vmatprep.subr.mxu0 0.0
        %1768 = vmatpush1.msra.mxu0 0.0
        %1769 = vmatprep.subr.mxu0 0.0
        %1770 = vmatpush1.msra.mxu0 0.0
        %1771 = vmatprep.subr.mxu0 0.0
        %1772 = vmatpush1.msra.mxu0 0.0
        %1773 = vmatprep.subr.mxu0 0.0
        %1774 = vmatpush1.msra.mxu0 0.0
        %1775 = vmatprep.subr.mxu0 0.0
        %1776 = vmatpush1.msra.mxu0 0.0
        %1777 = vmatprep.subr.mxu0 0.0
        %1778 = vmatpush1.msra.mxu0 0.0
        %1779 = vmatprep.subr.mxu0 0.0
        %1780 = vmatpush1.msra.mxu0 0.0
        %1781 = vmatprep.subr.mxu0 0.0
        %1782 = vmatpush1.msra.mxu0 0.0
        %1783 = vmatprep.mubr.f32.mxu0 0.0
        %1784 = vmatmul.mubr.f32.gmra.mrb[0].mxu0 %v1575
        %v1785 = vpop.f32.mrb[0].mxu0
        %v1786 = vadd.f32 %v1572, %v1785
        %v1787 = vpop.f32.mrb[0].mxu0
        %v1788 = vadd.f32 %v1572, %v1787
        %1789 = vdwg.mxu0
        %1790 = vmatprep.subr.mxu0 %v1543
        %1791 = vmatpush1.msra.mxu0 %v1542
        %1792 = vmatprep.subr.mxu0 %v1551
        %1793 = vmatpush1.msra.mxu0 %v1550
        %1794 = vmatprep.subr.mxu0 %v1559
        %1795 = vmatpush1.msra.mxu0 %v1558
        %1796 = vmatprep.subr.mxu0 %v1567
        %1797 = vmatpush1.msra.mxu0 %v1566
        %1798 = vmatprep.subr.mxu0 0.0
        %1799 = vmatpush1.msra.mxu0 0.0
        %1800 = vmatprep.subr.mxu0 0.0
        %1801 = vmatpush1.msra.mxu0 0.0
        %1802 = vmatprep.subr.mxu0 0.0
        %1803 = vmatpush1.msra.mxu0 0.0
        %1804 = vmatprep.subr.mxu0 0.0
        %1805 = vmatpush1.msra.mxu0 0.0
        %1806 = vmatprep.subr.mxu0 0.0
        %1807 = vmatpush1.msra.mxu0 0.0
        %1808 = vmatprep.subr.mxu0 0.0
        %1809 = vmatpush1.msra.mxu0 0.0
        %1810 = vmatprep.subr.mxu0 0.0
        %1811 = vmatpush1.msra.mxu0 0.0
        %1812 = vmatprep.subr.mxu0 0.0
        %1813 = vmatpush1.msra.mxu0 0.0
        %1814 = vmatprep.subr.mxu0 0.0
        %1815 = vmatpush1.msra.mxu0 0.0
        %1816 = vmatprep.subr.mxu0 0.0
        %1817 = vmatpush1.msra.mxu0 0.0
        %1818 = vmatprep.subr.mxu0 0.0
        %1819 = vmatpush1.msra.mxu0 0.0
        %1820 = vmatprep.subr.mxu0 0.0
        %1821 = vmatpush1.msra.mxu0 0.0
        %1822 = vmatprep.subr.mxu0 0.0
        %1823 = vmatpush1.msra.mxu0 0.0
        %1824 = vmatprep.subr.mxu0 0.0
        %1825 = vmatpush1.msra.mxu0 0.0
        %1826 = vmatprep.subr.mxu0 0.0
        %1827 = vmatpush1.msra.mxu0 0.0
        %1828 = vmatprep.subr.mxu0 0.0
        %1829 = vmatpush1.msra.mxu0 0.0
        %1830 = vmatprep.subr.mxu0 0.0
        %1831 = vmatpush1.msra.mxu0 0.0
        %1832 = vmatprep.subr.mxu0 0.0
        %1833 = vmatpush1.msra.mxu0 0.0
        %1834 = vmatprep.subr.mxu0 0.0
        %1835 = vmatpush1.msra.mxu0 0.0
        %1836 = vmatprep.subr.mxu0 0.0
        %1837 = vmatpush1.msra.mxu0 0.0
        %1838 = vmatprep.subr.mxu0 0.0
        %1839 = vmatpush1.msra.mxu0 0.0
        %1840 = vmatprep.subr.mxu0 0.0
        %1841 = vmatpush1.msra.mxu0 0.0
        %1842 = vmatprep.subr.mxu0 0.0
        %1843 = vmatpush1.msra.mxu0 0.0
        %1844 = vmatprep.subr.mxu0 0.0
        %1845 = vmatpush1.msra.mxu0 0.0
        %1846 = vmatprep.subr.mxu0 0.0
        %1847 = vmatpush1.msra.mxu0 0.0
        %1848 = vmatprep.subr.mxu0 0.0
        %1849 = vmatpush1.msra.mxu0 0.0
        %1850 = vmatprep.subr.mxu0 0.0
        %1851 = vmatpush1.msra.mxu0 0.0
        %1852 = vmatprep.subr.mxu0 0.0
        %1853 = vmatpush1.msra.mxu0 0.0
        %1854 = vmatprep.mubr.f32.mxu0 0.0
        %1855 = vmatmul.mubr.f32.gmra.mrb[0].mxu0 %v1575
        %v1856 = vpop.f32.mrb[0].mxu0
        %v1857 = vadd.f32 %v1572, %v1856
        %v1858 = vpop.f32.mrb[0].mxu0
        %v1859 = vadd.f32 %v1572, %v1858
        %1860 = vdwg.mxu0
        %v1869 = vcombine.low %v1644, %v1646
        %v1870 = vcombine.low %v1715, %v1717
        %v1871 = vcombine.low %v1786, %v1788
        %v1872 = vcombine.low %v1857, %v1859
        %v1874 = vunpack.c.l.s4 1966171168
        %v1875 = vunpack.c.0.s8 %v1874
        %v1876 = vlaneseq
        %v1877 = vshrl.u32 %v1876, 7
        %v1878 = vsub.s32 %v1875, %v1877
        %v1879 = vrot.slane %v1869, %v1878
        %v1881 = vunpack.c.l.s4 1966171168
        %v1882 = vunpack.c.0.s8 %v1881
        %v1883 = vlaneseq
        %v1884 = vshrl.u32 %v1883, 7
        %v1885 = vsub.s32 %v1882, %v1884
        %v1886 = vrot.slane %v1870, %v1885
        %v1888 = vunpack.c.l.s4 1966171168
        %v1889 = vunpack.c.0.s8 %v1888
        %v1890 = vlaneseq
        %v1891 = vshrl.u32 %v1890, 7
        %v1892 = vsub.s32 %v1889, %v1891
        %v1893 = vrot.slane %v1871, %v1892
        %v1895 = vunpack.c.l.s4 1966171168
        %v1896 = vunpack.c.0.s8 %v1895
        %v1897 = vlaneseq
        %v1898 = vshrl.u32 %v1897, 7
        %v1899 = vsub.s32 %v1896, %v1898
        %v1900 = vrot.slane %v1872, %v1899
        %v1901 = vcombine.low %v1879, %v1886
        %v1902 = vcombine.low %v1893, %v1900
        %v1904 = vunpack.c.l.s4 1966171168
        %v1905 = vunpack.c.0.s8 %v1904
        %v1906 = vlaneseq
        %v1907 = vshrl.u32 %v1906, 7
        %v1908 = vsub.s32 %v1905, %v1907
        %v1909 = vrot.slane %v1901, %v1908
        %v1911 = vunpack.c.l.s4 1966171168
        %v1912 = vunpack.c.0.s8 %v1911
        %v1913 = vlaneseq
        %v1914 = vshrl.u32 %v1913, 7
        %v1915 = vsub.s32 %v1912, %v1914
        %v1916 = vrot.slane %v1902, %v1915
        %v1917 = vcombine.low %v1909, %v1916
        %1919 = vst [vmem:[%s218] sm:$0xff] %v1917
        %s1920 = sand.u32 %s137, 1
        %s1921 = scalar_lea.sflag [#allocation3], %s1920
        %s1922 = sand.u32 %s137, 1
        %s1923 = smul.addr %s1922, 8
        %s1924 = scalar_lea.vmem [#allocation2], %s1923
        // Predicated region
        $region41: #{pinn_forward.1} parent=39 // pred_check
          %p1925 = pneg %p147
        $region42: #{pinn_forward.1} parent=39 // pred_check_branch
          %1927 = sbr.rel (%p1925) target = $region44
        $region43: #{pinn_forward.1} parent=39 // pred_region
          %s1928 = smul.u32 8, %s19
          %s1930 = ssub.s32 128, 128
          %1931 = vsyncadd %s1921, %s1930
          %s1932 = smul.addr %s1928, 16
          %s1933 = scalar_lea.hbm %s5, %s1932
          %s1935 = sshll.u32 %s1924, 4
          %s1936 = int_to_ptr.vmem [resolvable:$true] %s1935
          %1938 = dma.vmem_to_hbm [thread:$0]  %s1936, 128, %s1933, %s1921
        $region44: #{pinn_forward.1} parent=39 // pred_fallthru
          _
      $region40: #{pinn_forward.1} parent=5 // pred_fallthru
        _
      %p1939 = scmp.le.s32.totalorder 2, %s14
      // Predicated region
      $region45: #{pinn_forward.1} parent=5 // pred_check
        %p1940 = pneg %p1939
      $region46: #{pinn_forward.1} parent=5 // pred_check_branch
        %1942 = sbr.rel (%p1940) target = $region48
      $region47: #{pinn_forward.1} parent=5 // pred_region
        %s1943 = ssub.s32 %s14, 2
        // Predicated region
        $region49: #{pinn_forward.1} parent=47 // pred_check
          %p1944 = pneg %p153
        $region50: #{pinn_forward.1} parent=47 // pred_check_branch
          %1946 = sbr.rel (%p1944) target = $region52
        $region51: #{pinn_forward.1} parent=47 // pred_region
          %s1947 = sand.u32 %s138, 1
          %s1948 = scalar_lea.sflag [#allocation3], %s1947
          %s1949 = sand.u32 %s138, 1
          %s1950 = smul.addr %s1949, 8
          %s1951 = scalar_lea.vmem [#allocation2], %s1950
          %1952 = dma.done %s1948, 128
        $region52: #{pinn_forward.1} parent=47 // pred_fallthru
          _
      $region48: #{pinn_forward.1} parent=5 // pred_fallthru
        _
    $region6: #{pinn_forward.1} parent=1 // loop_footer
      %s18 = sadd.s32 1, %s14
    $region7: #{pinn_forward.1} parent=1 // loop_footer_branch
      %13 = sbr.rel target = $region3
    $region8: #{pinn_forward.1} parent=1 // loop_exit
      _
    %1953 = vsyncpa [#allocation3], 1
    %s1954 = scalar_lea.sflag [#allocation3], 1
    %1955 = vsyncpa %s1954, 1

</llo_original>
